<compile_context>
chip_gen: v7x
topology: tpu7x:2x2x1
jax: 0.10.0
libtpu: 0.0.40
codegen_flags: <defaults>
</compile_context>

<pallas_src>
import functools

import jax
import jax.numpy as jnp
from jax.experimental import pallas as pl
from jax.experimental.pallas import tpu as pltpu


# ---------------------------------------------------------------------------
# Pallas kernel: fused (patches @ W) + bias + LeakyReLU(0.2)
#   x_ref: (tm, K) bf16   -- M-tile of im2col patches
#   w_ref: (K,  N) bf16   -- folded conv+BN weights (VMEM-stationary)
#   b_ref: (1,  N) f32    -- folded bias            (VMEM-stationary)
#   o_ref: (tm, N) f32
# ---------------------------------------------------------------------------
def _conv_mm_lrelu_kernel(x_ref, w_ref, b_ref, o_ref):
    acc = jnp.dot(x_ref[...], w_ref[...], preferred_element_type=jnp.float32)
    acc = acc + b_ref[...]                      # (1, N) broadcast over rows
    o_ref[...] = jnp.where(acc >= 0.0, acc, 0.2 * acc).astype(o_ref.dtype)


def _matmul_bias_lrelu(patches, w, b, *, tm_cap=256):
    """patches: (M, K) bf16, w: (K, N) bf16, b: (N,) f32 -> (M, N) f32.

    M-tiled, software-pipelined, weight-stationary fused matmul. tm_cap=256
    keeps the double-buffered VMEM footprint tiny (<1 MiB for this network's
    K <= 512) and well under v7x's 64 MiB physical / 32 MiB scoped VMEM;
    raise toward 512-1024 rows for very large M.
    """
    M, K = patches.shape
    _, N = w.shape
    tm = M if M <= tm_cap else tm_cap           # full-dim block when M is small
    grid = (pl.cdiv(M, tm),)

    b2 = b.reshape(1, N).astype(jnp.float32)

    cost = pl.CostEstimate(
        flops=2 * M * K * N,
        transcendentals=0,
        bytes_accessed=M * K * 2 + K * N * 2 + M * N * 4,
    )

    return pl.pallas_call(
        _conv_mm_lrelu_kernel,
        out_shape=jax.ShapeDtypeStruct((M, N), jnp.float32),
        grid=grid,
        in_specs=[
            # M-tiled patches; K is the full array extent (no lane padding copy).
            pl.BlockSpec((tm, K), lambda i: (i, 0)),
            # Weights / bias: constant block index -> kept resident in VMEM.
            pl.BlockSpec((K, N), lambda i: (0, 0)),
            pl.BlockSpec((1, N), lambda i: (0, 0)),
        ],
        out_specs=pl.BlockSpec((tm, N), lambda i: (i, 0)),
        compiler_params=pltpu.CompilerParams(
            # M tiles are independent -> megacore sharding on v7x, no-op on v5e/v6e.
            dimension_semantics=("parallel",),
            # Explicit scoped-VMEM budget, portable across v5e/v6e/v7x.
            vmem_limit_bytes=32 * 1024 * 1024,
        ),
        cost_estimate=cost,
    )(patches, w, b2)


# ---------------------------------------------------------------------------
# Conv layer glue: pad + im2col (pure data movement), hot path in Pallas.
# ---------------------------------------------------------------------------
def _im2col(x_nhwc, ksize, stride, pad):
    N, H, W, C = x_nhwc.shape
    Ho = (H + 2 * pad - ksize) // stride + 1
    Wo = (W + 2 * pad - ksize) // stride + 1
    xp = jnp.pad(x_nhwc, ((0, 0), (pad, pad), (pad, pad), (0, 0)))
    cols = []
    for kh in range(ksize):
        for kw in range(ksize):
            cols.append(xp[:, kh:kh + stride * Ho:stride,
                           kw:kw + stride * Wo:stride, :])
    p = jnp.stack(cols, axis=3)                      # (N, Ho, Wo, K*K, C)
    return p.reshape(N * Ho * Wo, ksize * ksize * C), (N, Ho, Wo)


def conv_bn_lrelu(x_nhwc, w_oihw, b_o, stride, pad, bn=None):
    """w_oihw: (Cout, Cin, KH, KW) PyTorch layout. bn = (gamma, beta, mean, var, eps) or None."""
    Cout, Cin, KH, KW = w_oihw.shape
    if bn is not None:
        gamma, beta, mean, var, eps = bn
        scale = gamma / jnp.sqrt(var + eps)
        w_eff = w_oihw * scale[:, None, None, None]
        b_eff = (b_o - mean) * scale + beta
    else:
        w_eff, b_eff = w_oihw, b_o

    # (Cout, Cin, KH, KW) -> (KH, KW, Cin, Cout) -> (KH*KW*Cin, Cout), matching
    # the im2col K ordering. bf16 for the MXU; bias stays f32.
    w_mat = jnp.transpose(w_eff, (2, 3, 1, 0)).reshape(KH * KW * Cin, Cout)
    w_mat = w_mat.astype(jnp.bfloat16)

    # Cast the activation once so the 16x-expanded im2col tensor is bf16
    # (halves its HBM/VMEM footprint); accumulation stays f32 in the kernel.
    patches, (N, Ho, Wo) = _im2col(x_nhwc.astype(jnp.bfloat16), KH, stride, pad)
    out = _matmul_bias_lrelu(patches, w_mat, b_eff.astype(jnp.float32))
    return out.reshape(N, Ho, Wo, Cout)


# ---------------------------------------------------------------------------
# ImageEmbedding parameters + forward
# ---------------------------------------------------------------------------
def init_params(key, ndf):
    nc = 3
    specs = [
        (nc, ndf, True),           # layer1
        (ndf, ndf * 2, True),      # layer2
        (ndf * 2, ndf * 4, True),  # layer3
        (ndf * 4, 16, False),      # layer4 (no BN)
    ]
    params = []
    for cin, cout, has_bn in specs:
        key, kw, kb, kg, kbe, km, kv = jax.random.split(key, 7)
        w = 0.05 * jax.random.normal(kw, (cout, cin, 4, 4), jnp.float32)
        b = 0.05 * jax.random.normal(kb, (cout,), jnp.float32)
        if has_bn:
            bn = (
                1.0 + 0.1 * jax.random.normal(kg, (cout,), jnp.float32),            # gamma
                0.1 * jax.random.normal(kbe, (cout,), jnp.float32),                 # beta
                0.1 * jax.random.normal(km, (cout,), jnp.float32),                  # running_mean
                1.0 + 0.1 * jnp.abs(jax.random.normal(kv, (cout,), jnp.float32)),   # running_var
                1e-5,
            )
        else:
            bn = None
        params.append((w, b, bn))
    return params


_STRIDES_PADS = [(2, 1), (2, 1), (2, 1), (1, 0)]


@jax.jit
def image_embedding_forward(x_nchw, params):
    # NCHW (PyTorch) -> NHWC internal
    x = jnp.transpose(x_nchw, (0, 2, 3, 1)).astype(jnp.float32)
    for (w, b, bn), (s, p) in zip(params, _STRIDES_PADS):
        x = conv_bn_lrelu(x, w, b, stride=s, pad=p, bn=bn)
    # NHWC -> NCHW to match PyTorch output convention
    return jnp.transpose(x, (0, 3, 1, 2))


@jax.jit
def _reference_forward(x_nchw, params):
    """Pure-XLA f32 reference (eval-mode BN), for a numerics sanity check."""
    x = x_nchw.astype(jnp.float32)
    for (w, b, bn), (s, p) in zip(params, _STRIDES_PADS):
        y = jax.lax.conv_general_dilated(
            x, w, window_strides=(s, s), padding=[(p, p), (p, p)],
            dimension_numbers=("NCHW", "OIHW", "NCHW"))
        y = y + b[None, :, None, None]
        if bn is not None:
            gamma, beta, mean, var, eps = bn
            y = (y - mean[None, :, None, None]) * (
                gamma[None, :, None, None]
                / jnp.sqrt(var[None, :, None, None] + eps)) + beta[None, :, None, None]
        x = jnp.where(y >= 0.0, y, 0.2 * y)
    return x


if __name__ == "__main__":
    key = jax.random.PRNGKey(0)
    k_x, k_p = jax.random.split(key)

    ndf = 8
    # spatial must be 32 so layer4's 4x4 valid conv sees a 4x4 map -> 1x1 output
    x = jax.random.normal(k_x, (2, 3, 32, 32), jnp.float32)   # NCHW

    params = init_params(k_p, ndf)

    out = image_embedding_forward(x, params)
    out = jax.block_until_ready(out)

    assert out.shape == (2, 16, 1, 1), out.shape
    assert bool(jnp.all(jnp.isfinite(out)))

    # Loose tolerance: bf16 MXU inputs with f32 accumulation vs f32 reference.
    ref = jax.block_until_ready(_reference_forward(x, params))
    max_diff = float(jnp.max(jnp.abs(out - ref)))
    assert max_diff < 1e-1, f"max |pallas - ref| = {max_diff}"

    print("KERNEL_OK")
</pallas_src>

<mosaic_0001>
module attributes {stable_mosaic.version = 11 : i64} {
  func.func @_conv_mm_lrelu_kernel(%arg0: i32, %arg1: memref<256x48xbf16, #tpu.memory_space<vmem>>, %arg2: memref<48x8xbf16, #tpu.memory_space<vmem>>, %arg3: memref<1x8xf32, #tpu.memory_space<vmem>>, %arg4: memref<256x8xf32, #tpu.memory_space<vmem>>) attributes {dimension_semantics = [#tpu.dimension_semantics<parallel>], iteration_bounds = array<i64: 2>, scalar_prefetch = 0 : i64, scratch_operands = 0 : i64, tpu.core_type = #tpu.core_type<tc>, window_params = [{transform_indices = @transform_0, window_bounds = array<i64: 256, 48>}, {pipeline_mode = #tpu.pipeline_mode<synchronous>, transform_indices = @transform_1, window_bounds = array<i64: 48, 8>}, {pipeline_mode = #tpu.pipeline_mode<synchronous>, transform_indices = @transform_2, window_bounds = array<i64: 1, 8>}, {transform_indices = @transform_3, window_bounds = array<i64: 256, 8>}]} {
    %c0 = arith.constant 0 : index
    %c0_0 = arith.constant 0 : index
    %0 = vector.load %arg1[%c0, %c0_0] : memref<256x48xbf16, #tpu.memory_space<vmem>>, vector<256x48xbf16>
    %c0_1 = arith.constant 0 : index
    %c0_2 = arith.constant 0 : index
    %1 = vector.load %arg2[%c0_1, %c0_2] : memref<48x8xbf16, #tpu.memory_space<vmem>>, vector<48x8xbf16>
    %cst = arith.constant dense<0.000000e+00> : vector<256x8xf32>
    %2 = tpu.matmul %0, %1, %cst {dimension_numbers = #tpu.dot_dimension_numbers<[1], [0], [0], [1], [0, 0, 1, 1], [], []>} : vector<256x48xbf16>, vector<48x8xbf16>, vector<256x8xf32> -> vector<256x8xf32>
    %c0_3 = arith.constant 0 : index
    %c0_4 = arith.constant 0 : index
    %3 = vector.load %arg3[%c0_3, %c0_4] : memref<1x8xf32, #tpu.memory_space<vmem>>, vector<1x8xf32>
    %4 = vector.broadcast %3 : vector<1x8xf32> to vector<256x8xf32>
    %5 = arith.addf %2, %4 : vector<256x8xf32>
    %cst_5 = arith.constant 0.000000e+00 : f32
    %6 = vector.broadcast %cst_5 : f32 to vector<256x8xf32>
    %7 = arith.cmpf oge, %5, %6 : vector<256x8xf32>
    %cst_6 = arith.constant 2.000000e-01 : f32
    %8 = vector.broadcast %cst_6 : f32 to vector<256x8xf32>
    %9 = arith.mulf %8, %5 : vector<256x8xf32>
    %10 = arith.select %7, %5, %9 : vector<256x8xi1>, vector<256x8xf32>
    %c0_7 = arith.constant 0 : index
    %c0_8 = arith.constant 0 : index
    %11 = vector.load %arg4[%c0_7, %c0_8] : memref<256x8xf32, #tpu.memory_space<vmem>>, vector<256x8xf32>
    tpu.vector_store %arg4[%c0_7, %c0_8], %10 {strides = array<i32>} : memref<256x8xf32, #tpu.memory_space<vmem>>, vector<256x8xf32>,
    return
  }
  func.func @transform_0(%arg0: i32) -> (i32, i32) {
    %c0_i32 = arith.constant 0 : i32
    %c0_i32_0 = arith.constant 0 : i32
    return %arg0, %c0_i32 : i32, i32
  }
  func.func @transform_1(%arg0: i32) -> (i32, i32) {
    %c0_i32 = arith.constant 0 : i32
    %c0_i32_0 = arith.constant 0 : i32
    %c0_i32_1 = arith.constant 0 : i32
    return %c0_i32, %c0_i32_0 : i32, i32
  }
  func.func @transform_2(%arg0: i32) -> (i32, i32) {
    %c0_i32 = arith.constant 0 : i32
    %c0_i32_0 = arith.constant 0 : i32
    %c0_i32_1 = arith.constant 0 : i32
    return %c0_i32, %c0_i32_0 : i32, i32
  }
  func.func @transform_3(%arg0: i32) -> (i32, i32) {
    %c0_i32 = arith.constant 0 : i32
    %c0_i32_0 = arith.constant 0 : i32
    return %arg0, %c0_i32 : i32, i32
  }
}

module attributes {stable_mosaic.version = 11 : i64} {
  func.func @_conv_mm_lrelu_kernel(%arg0: i32, %arg1: memref<128x128xbf16, #tpu.memory_space<vmem>>, %arg2: memref<128x16xbf16, #tpu.memory_space<vmem>>, %arg3: memref<1x16xf32, #tpu.memory_space<vmem>>, %arg4: memref<128x16xf32, #tpu.memory_space<vmem>>) attributes {dimension_semantics = [#tpu.dimension_semantics<parallel>], iteration_bounds = array<i64: 1>, scalar_prefetch = 0 : i64, scratch_operands = 0 : i64, tpu.core_type = #tpu.core_type<tc>, window_params = [{transform_indices = @transform_0, window_bounds = array<i64: 128, 128>}, {pipeline_mode = #tpu.pipeline_mode<synchronous>, transform_indices = @transform_1, window_bounds = array<i64: 128, 16>}, {pipeline_mode = #tpu.pipeline_mode<synchronous>, transform_indices = @transform_2, window_bounds = array<i64: 1, 16>}, {transform_indices = @transform_3, window_bounds = array<i64: 128, 16>}]} {
    %c0 = arith.constant 0 : index
    %c0_0 = arith.constant 0 : index
    %0 = vector.load %arg1[%c0, %c0_0] : memref<128x128xbf16, #tpu.memory_space<vmem>>, vector<128x128xbf16>
    %c0_1 = arith.constant 0 : index
    %c0_2 = arith.constant 0 : index
    %1 = vector.load %arg2[%c0_1, %c0_2] : memref<128x16xbf16, #tpu.memory_space<vmem>>, vector<128x16xbf16>
    %cst = arith.constant dense<0.000000e+00> : vector<128x16xf32>
    %2 = tpu.matmul %0, %1, %cst {dimension_numbers = #tpu.dot_dimension_numbers<[1], [0], [0], [1], [0, 0, 1, 1], [], []>} : vector<128x128xbf16>, vector<128x16xbf16>, vector<128x16xf32> -> vector<128x16xf32>
    %c0_3 = arith.constant 0 : index
    %c0_4 = arith.constant 0 : index
    %3 = vector.load %arg3[%c0_3, %c0_4] : memref<1x16xf32, #tpu.memory_space<vmem>>, vector<1x16xf32>
    %4 = vector.broadcast %3 : vector<1x16xf32> to vector<128x16xf32>
    %5 = arith.addf %2, %4 : vector<128x16xf32>
    %cst_5 = arith.constant 0.000000e+00 : f32
    %6 = vector.broadcast %cst_5 : f32 to vector<128x16xf32>
    %7 = arith.cmpf oge, %5, %6 : vector<128x16xf32>
    %cst_6 = arith.constant 2.000000e-01 : f32
    %8 = vector.broadcast %cst_6 : f32 to vector<128x16xf32>
    %9 = arith.mulf %8, %5 : vector<128x16xf32>
    %10 = arith.select %7, %5, %9 : vector<128x16xi1>, vector<128x16xf32>
    %c0_7 = arith.constant 0 : index
    %c0_8 = arith.constant 0 : index
    %11 = vector.load %arg4[%c0_7, %c0_8] : memref<128x16xf32, #tpu.memory_space<vmem>>, vector<128x16xf32>
    tpu.vector_store %arg4[%c0_7, %c0_8], %10 {strides = array<i32>} : memref<128x16xf32, #tpu.memory_space<vmem>>, vector<128x16xf32>,
    return
  }
  func.func @transform_0(%arg0: i32) -> (i32, i32) {
    %c0_i32 = arith.constant 0 : i32
    %c0_i32_0 = arith.constant 0 : i32
    return %arg0, %c0_i32 : i32, i32
  }
  func.func @transform_1(%arg0: i32) -> (i32, i32) {
    %c0_i32 = arith.constant 0 : i32
    %c0_i32_0 = arith.constant 0 : i32
    %c0_i32_1 = arith.constant 0 : i32
    return %c0_i32, %c0_i32_0 : i32, i32
  }
  func.func @transform_2(%arg0: i32) -> (i32, i32) {
    %c0_i32 = arith.constant 0 : i32
    %c0_i32_0 = arith.constant 0 : i32
    %c0_i32_1 = arith.constant 0 : i32
    return %c0_i32, %c0_i32_0 : i32, i32
  }
  func.func @transform_3(%arg0: i32) -> (i32, i32) {
    %c0_i32 = arith.constant 0 : i32
    %c0_i32_0 = arith.constant 0 : i32
    return %arg0, %c0_i32 : i32, i32
  }
}

module attributes {stable_mosaic.version = 11 : i64} {
  func.func @_conv_mm_lrelu_kernel(%arg0: i32, %arg1: memref<32x256xbf16, #tpu.memory_space<vmem>>, %arg2: memref<256x32xbf16, #tpu.memory_space<vmem>>, %arg3: memref<1x32xf32, #tpu.memory_space<vmem>>, %arg4: memref<32x32xf32, #tpu.memory_space<vmem>>) attributes {dimension_semantics = [#tpu.dimension_semantics<parallel>], iteration_bounds = array<i64: 1>, scalar_prefetch = 0 : i64, scratch_operands = 0 : i64, tpu.core_type = #tpu.core_type<tc>, window_params = [{transform_indices = @transform_0, window_bounds = array<i64: 32, 256>}, {pipeline_mode = #tpu.pipeline_mode<synchronous>, transform_indices = @transform_1, window_bounds = array<i64: 256, 32>}, {pipeline_mode = #tpu.pipeline_mode<synchronous>, transform_indices = @transform_2, window_bounds = array<i64: 1, 32>}, {transform_indices = @transform_3, window_bounds = array<i64: 32, 32>}]} {
    %c0 = arith.constant 0 : index
    %c0_0 = arith.constant 0 : index
    %0 = vector.load %arg1[%c0, %c0_0] : memref<32x256xbf16, #tpu.memory_space<vmem>>, vector<32x256xbf16>
    %c0_1 = arith.constant 0 : index
    %c0_2 = arith.constant 0 : index
    %1 = vector.load %arg2[%c0_1, %c0_2] : memref<256x32xbf16, #tpu.memory_space<vmem>>, vector<256x32xbf16>
    %cst = arith.constant dense<0.000000e+00> : vector<32x32xf32>
    %2 = tpu.matmul %0, %1, %cst {dimension_numbers = #tpu.dot_dimension_numbers<[1], [0], [0], [1], [0, 0, 1, 1], [], []>} : vector<32x256xbf16>, vector<256x32xbf16>, vector<32x32xf32> -> vector<32x32xf32>
    %c0_3 = arith.constant 0 : index
    %c0_4 = arith.constant 0 : index
    %3 = vector.load %arg3[%c0_3, %c0_4] : memref<1x32xf32, #tpu.memory_space<vmem>>, vector<1x32xf32>
    %4 = vector.broadcast %3 : vector<1x32xf32> to vector<32x32xf32>
    %5 = arith.addf %2, %4 : vector<32x32xf32>
    %cst_5 = arith.constant 0.000000e+00 : f32
    %6 = vector.broadcast %cst_5 : f32 to vector<32x32xf32>
    %7 = arith.cmpf oge, %5, %6 : vector<32x32xf32>
    %cst_6 = arith.constant 2.000000e-01 : f32
    %8 = vector.broadcast %cst_6 : f32 to vector<32x32xf32>
    %9 = arith.mulf %8, %5 : vector<32x32xf32>
    %10 = arith.select %7, %5, %9 : vector<32x32xi1>, vector<32x32xf32>
    %c0_7 = arith.constant 0 : index
    %c0_8 = arith.constant 0 : index
    %11 = vector.load %arg4[%c0_7, %c0_8] : memref<32x32xf32, #tpu.memory_space<vmem>>, vector<32x32xf32>
    tpu.vector_store %arg4[%c0_7, %c0_8], %10 {strides = array<i32>} : memref<32x32xf32, #tpu.memory_space<vmem>>, vector<32x32xf32>,
    return
  }
  func.func @transform_0(%arg0: i32) -> (i32, i32) {
    %c0_i32 = arith.constant 0 : i32
    %c0_i32_0 = arith.constant 0 : i32
    return %arg0, %c0_i32 : i32, i32
  }
  func.func @transform_1(%arg0: i32) -> (i32, i32) {
    %c0_i32 = arith.constant 0 : i32
    %c0_i32_0 = arith.constant 0 : i32
    %c0_i32_1 = arith.constant 0 : i32
    return %c0_i32, %c0_i32_0 : i32, i32
  }
  func.func @transform_2(%arg0: i32) -> (i32, i32) {
    %c0_i32 = arith.constant 0 : i32
    %c0_i32_0 = arith.constant 0 : i32
    %c0_i32_1 = arith.constant 0 : i32
    return %c0_i32, %c0_i32_0 : i32, i32
  }
  func.func @transform_3(%arg0: i32) -> (i32, i32) {
    %c0_i32 = arith.constant 0 : i32
    %c0_i32_0 = arith.constant 0 : i32
    return %arg0, %c0_i32 : i32, i32
  }
}

module attributes {stable_mosaic.version = 11 : i64} {
  func.func @_conv_mm_lrelu_kernel(%arg0: i32, %arg1: memref<2x512xbf16, #tpu.memory_space<vmem>>, %arg2: memref<512x16xbf16, #tpu.memory_space<vmem>>, %arg3: memref<1x16xf32, #tpu.memory_space<vmem>>, %arg4: memref<2x16xf32, #tpu.memory_space<vmem>>) attributes {dimension_semantics = [#tpu.dimension_semantics<parallel>], iteration_bounds = array<i64: 1>, scalar_prefetch = 0 : i64, scratch_operands = 0 : i64, tpu.core_type = #tpu.core_type<tc>, window_params = [{transform_indices = @transform_0, window_bounds = array<i64: 2, 512>}, {pipeline_mode = #tpu.pipeline_mode<synchronous>, transform_indices = @transform_1, window_bounds = array<i64: 512, 16>}, {pipeline_mode = #tpu.pipeline_mode<synchronous>, transform_indices = @transform_2, window_bounds = array<i64: 1, 16>}, {transform_indices = @transform_3, window_bounds = array<i64: 2, 16>}]} {
    %c0 = arith.constant 0 : index
    %c0_0 = arith.constant 0 : index
    %0 = vector.load %arg1[%c0, %c0_0] : memref<2x512xbf16, #tpu.memory_space<vmem>>, vector<2x512xbf16>
    %c0_1 = arith.constant 0 : index
    %c0_2 = arith.constant 0 : index
    %1 = vector.load %arg2[%c0_1, %c0_2] : memref<512x16xbf16, #tpu.memory_space<vmem>>, vector<512x16xbf16>
    %cst = arith.constant dense<0.000000e+00> : vector<2x16xf32>
    %2 = tpu.matmul %0, %1, %cst {dimension_numbers = #tpu.dot_dimension_numbers<[1], [0], [0], [1], [0, 0, 1, 1], [], []>} : vector<2x512xbf16>, vector<512x16xbf16>, vector<2x16xf32> -> vector<2x16xf32>
    %c0_3 = arith.constant 0 : index
    %c0_4 = arith.constant 0 : index
    %3 = vector.load %arg3[%c0_3, %c0_4] : memref<1x16xf32, #tpu.memory_space<vmem>>, vector<1x16xf32>
    %4 = vector.broadcast %3 : vector<1x16xf32> to vector<2x16xf32>
    %5 = arith.addf %2, %4 : vector<2x16xf32>
    %cst_5 = arith.constant 0.000000e+00 : f32
    %6 = vector.broadcast %cst_5 : f32 to vector<2x16xf32>
    %7 = arith.cmpf oge, %5, %6 : vector<2x16xf32>
    %cst_6 = arith.constant 2.000000e-01 : f32
    %8 = vector.broadcast %cst_6 : f32 to vector<2x16xf32>
    %9 = arith.mulf %8, %5 : vector<2x16xf32>
    %10 = arith.select %7, %5, %9 : vector<2x16xi1>, vector<2x16xf32>
    %c0_7 = arith.constant 0 : index
    %c0_8 = arith.constant 0 : index
    %11 = vector.load %arg4[%c0_7, %c0_8] : memref<2x16xf32, #tpu.memory_space<vmem>>, vector<2x16xf32>
    tpu.vector_store %arg4[%c0_7, %c0_8], %10 {strides = array<i32>} : memref<2x16xf32, #tpu.memory_space<vmem>>, vector<2x16xf32>,
    return
  }
  func.func @transform_0(%arg0: i32) -> (i32, i32) {
    %c0_i32 = arith.constant 0 : i32
    %c0_i32_0 = arith.constant 0 : i32
    return %arg0, %c0_i32 : i32, i32
  }
  func.func @transform_1(%arg0: i32) -> (i32, i32) {
    %c0_i32 = arith.constant 0 : i32
    %c0_i32_0 = arith.constant 0 : i32
    %c0_i32_1 = arith.constant 0 : i32
    return %c0_i32, %c0_i32_0 : i32, i32
  }
  func.func @transform_2(%arg0: i32) -> (i32, i32) {
    %c0_i32 = arith.constant 0 : i32
    %c0_i32_0 = arith.constant 0 : i32
    %c0_i32_1 = arith.constant 0 : i32
    return %c0_i32, %c0_i32_0 : i32, i32
  }
  func.func @transform_3(%arg0: i32) -> (i32, i32) {
    %c0_i32 = arith.constant 0 : i32
    %c0_i32_0 = arith.constant 0 : i32
    return %arg0, %c0_i32 : i32, i32
  }
}

</mosaic_0001>

<llo_original>
// kernel: image_embedding_forward.4
$region0: #{image_embedding_forward.4}
  #allocation0 [shape = 'u32[]', space=smem, size = 0x4, offset = 0x4, fixed_abs, tag = 'smem constant byte address 0x4 - core index']
  #allocation1 [shape = 'u32[144,128]{1,0:T(1,128)}', space=vmem, size = 0x12000, scoped, tag = 'internal scratch']
  %s0 = inlined_call_operand.vmem [shape: bf16[512,48], index: 0, kind: input, shape index: {}]
  %s1 = inlined_call_operand.vmem [shape: bf16[48,8], index: 1, kind: input, shape index: {}]
  %s2 = inlined_call_operand.vmem [shape: f32[1,8], index: 2, kind: input, shape index: {}]
  %s3 = inlined_call_operand.vmem [shape: f32[512,8], index: 3, kind: output, shape index: {}]
  %s4 = sld [smem:[#allocation0]]
  $region45: #{image_embedding_forward.4} parent=0
    _
  %s6 = ssub.s32 1, %s4
  %s7 = scalar_select 0, %s6, %s4
  loop: start=0, step=1, limit=4
  $region2: #{image_embedding_forward.4} parent=0 // loop_pre_header
    _
  $region3: #{image_embedding_forward.4} parent=0 // loop_header
    %s9 = sphi 0, %s13
    %p10 = scmp.ge.s32.totalorder %s9, 4
    %s19 = sphi 0, %s21
    %s22 = sphi 0, %s19
    %s23 = sphi 0, %s22
    %s39 = sphi 0, %s23
    %s43 = sphi 0, %s43
    %s45 = sphi 0, %s43
    %s46 = sphi 0, %s45
    %s60 = sphi 0, %s46
    %s64 = sphi 0, %s64
    %s66 = sphi 0, %s64
    %s67 = sphi 0, %s66
    %s81 = sphi 0, %s67
    %s87 = sphi 0, %s89
    %s90 = sphi 0, %s87
    %s91 = sphi 0, %s90
    %s107 = sphi 0, %s91
  $region4: #{image_embedding_forward.4} parent=0 // loop_header_branch
    %12 = sbr.rel (%p10) target = $region8
  $region5: #{image_embedding_forward.4} parent=0 // loop_body
    %s14 = ssub.s32 %s9, 1
    %s15 = ssub.s32 %s9, 2
    %s16 = sadd.s32 %s9, 1
    %s17 = ssub.s32 %s9, %s16
    %p18 = scmp.eq.s32.totalorder %s17, 0
    %s20 = sadd.s32 %s19, 1
    %s21 = scalar_select %p18, %s19, %s20
    %p24 = pneg %p18
    %p25 = scmp.eq.s32.totalorder %s9, 1
    %p26 = por %p24, %p25
    %p27 = scmp.ne.s32.totalorder %s19, %s22
    %p28 = scmp.eq.s32.totalorder %s9, 0
    %p29 = por %p27, %p28
    %p30 = scmp.ne.s32.totalorder %s19, %s22
    %p31 = scmp.eq.s32.totalorder %s14, 1
    %p32 = por %p30, %p31
    %p33 = scmp.ne.s32.totalorder %s22, %s23
    %p34 = scmp.eq.s32.totalorder %s14, 0
    %p35 = por %p33, %p34
    %p36 = scmp.ne.s32.totalorder %s22, %s23
    %p37 = scmp.eq.s32.totalorder %s15, 1
    %p38 = por %p36, %p37
    %p40 = scmp.ne.s32.totalorder %s23, %s39
    %p41 = scmp.eq.s32.totalorder %s15, 0
    %p42 = por %p40, %p41
    %s44 = sadd.s32 %s43, 1
    %p47 = scmp.eq.s32.totalorder %s9, 1
    %p48 = scmp.ne.s32.totalorder %s43, %s45
    %p49 = scmp.eq.s32.totalorder %s9, 0
    %p50 = por %p48, %p49
    %p51 = scmp.ne.s32.totalorder %s43, %s45
    %p52 = scmp.eq.s32.totalorder %s14, 1
    %p53 = por %p51, %p52
    %p54 = scmp.ne.s32.totalorder %s45, %s46
    %p55 = scmp.eq.s32.totalorder %s14, 0
    %p56 = por %p54, %p55
    %p57 = scmp.ne.s32.totalorder %s45, %s46
    %p58 = scmp.eq.s32.totalorder %s15, 1
    %p59 = por %p57, %p58
    %p61 = scmp.ne.s32.totalorder %s46, %s60
    %p62 = scmp.eq.s32.totalorder %s15, 0
    %p63 = por %p61, %p62
    %s65 = sadd.s32 %s64, 1
    %p68 = scmp.eq.s32.totalorder %s9, 1
    %p69 = scmp.ne.s32.totalorder %s64, %s66
    %p70 = scmp.eq.s32.totalorder %s9, 0
    %p71 = por %p69, %p70
    %p72 = scmp.ne.s32.totalorder %s64, %s66
    %p73 = scmp.eq.s32.totalorder %s14, 1
    %p74 = por %p72, %p73
    %p75 = scmp.ne.s32.totalorder %s66, %s67
    %p76 = scmp.eq.s32.totalorder %s14, 0
    %p77 = por %p75, %p76
    %p78 = scmp.ne.s32.totalorder %s66, %s67
    %p79 = scmp.eq.s32.totalorder %s15, 1
    %p80 = por %p78, %p79
    %p82 = scmp.ne.s32.totalorder %s67, %s81
    %p83 = scmp.eq.s32.totalorder %s15, 0
    %p84 = por %p82, %p83
    %s85 = ssub.s32 %s9, %s16
    %p86 = scmp.eq.s32.totalorder %s85, 0
    %s88 = sadd.s32 %s87, 1
    %s89 = scalar_select %p86, %s87, %s88
    %p92 = pneg %p86
    %p93 = scmp.eq.s32.totalorder %s9, 1
    %p94 = por %p92, %p93
    %p95 = scmp.ne.s32.totalorder %s87, %s90
    %p96 = scmp.eq.s32.totalorder %s9, 0
    %p97 = por %p95, %p96
    %p98 = scmp.ne.s32.totalorder %s87, %s90
    %p99 = scmp.eq.s32.totalorder %s14, 1
    %p100 = por %p98, %p99
    %p101 = scmp.ne.s32.totalorder %s90, %s91
    %p102 = scmp.eq.s32.totalorder %s14, 0
    %p103 = por %p101, %p102
    %p104 = scmp.ne.s32.totalorder %s90, %s91
    %p105 = scmp.eq.s32.totalorder %s15, 1
    %p106 = por %p104, %p105
    %p108 = scmp.ne.s32.totalorder %s91, %s107
    %p109 = scmp.eq.s32.totalorder %s15, 0
    %p110 = por %p108, %p109
    %p111 = scmp.le.s32.totalorder 1, %s9
    %p112 = scmp.lt.s32.totalorder %s9, 3
    %p113 = pnand %p111, %p112
    %p114 = pneg %p113
    // Predicated region
    $region9: #{image_embedding_forward.4} parent=5 // pred_check
      _
    $region10: #{image_embedding_forward.4} parent=5 // pred_check_branch
      %116 = sbr.rel (%p113) target = $region12
    $region11: #{image_embedding_forward.4} parent=5 // pred_region
      %s117 = ssub.s32 %s9, 1
      // Predicated region
      $region13: #{image_embedding_forward.4} parent=11 // pred_check
        %p118 = pneg %p56
      $region14: #{image_embedding_forward.4} parent=11 // pred_check_branch
        %120 = sbr.rel (%p118) target = $region16
      $region15: #{image_embedding_forward.4} parent=11 // pred_region
        _
      $region16: #{image_embedding_forward.4} parent=11 // pred_fallthru
        _
      // Predicated region
      $region17: #{image_embedding_forward.4} parent=11 // pred_check
        %p121 = pneg %p77
      $region18: #{image_embedding_forward.4} parent=11 // pred_check_branch
        %123 = sbr.rel (%p121) target = $region20
      $region19: #{image_embedding_forward.4} parent=11 // pred_region
        _
      $region20: #{image_embedding_forward.4} parent=11 // pred_fallthru
        _
    $region12: #{image_embedding_forward.4} parent=5 // pred_fallthru
      _
    %p124 = scmp.lt.s32.totalorder %s9, 2
    // Predicated region
    $region21: #{image_embedding_forward.4} parent=5 // pred_check
      %p125 = pneg %p124
    $region22: #{image_embedding_forward.4} parent=5 // pred_check_branch
      %127 = sbr.rel (%p125) target = $region24
    $region23: #{image_embedding_forward.4} parent=5 // pred_region
      // Predicated region
      $region25: #{image_embedding_forward.4} parent=23 // pred_check
        %p128 = pneg %p29
      $region26: #{image_embedding_forward.4} parent=23 // pred_check_branch
        %130 = sbr.rel (%p128) target = $region28
      $region27: #{image_embedding_forward.4} parent=23 // pred_region
        %s131 = smul.u32 32, %s9
        %p132 = scmp.lt.s32.totalorder %s131, 63
        %s133 = scalar_select %p132, %s131, 63
        %s134 = smul.addr %s133, 4
        %s135 = scalar_lea.vmem %s0, %s134
        %s136 = smul.u32 32, %s9
      $region28: #{image_embedding_forward.4} parent=23 // pred_fallthru
        _
    $region24: #{image_embedding_forward.4} parent=5 // pred_fallthru
      _
    %p137 = scmp.le.s32.totalorder 1, %s9
    %p138 = scmp.lt.s32.totalorder %s9, 3
    %p139 = pnand %p137, %p138
    %p140 = pneg %p139
    // Predicated region
    $region29: #{image_embedding_forward.4} parent=5 // pred_check
      _
    $region30: #{image_embedding_forward.4} parent=5 // pred_check_branch
      %142 = sbr.rel (%p139) target = $region32
    $region31: #{image_embedding_forward.4} parent=5 // pred_region
      %s143 = ssub.s32 %s9, 1
      %s144 = smul.u32 32, %s14
      %p145 = scmp.lt.s32.totalorder %s144, 63
      %s146 = scalar_select %p145, %s144, 63
      %s147 = smul.addr %s146, 4
      %s148 = scalar_lea.vmem %s0, %s147
      %p149 = pneg %p35
      %p150 = pneg %p32
      %p151 = pneg %p56
      %p152 = pneg %p53
      %p153 = pneg %p77
      %p154 = pneg %p74
      %p155 = pneg %p103
      %p156 = pneg %p100
      %s157 = smul.u32 32, %s14
      %p158 = scmp.lt.s32.totalorder %s157, 63
      %s159 = scalar_select %p158, %s157, 63
      %s160 = smul.addr %s159, 8
      %s161 = scalar_lea.vmem %s3, %s160
      %s162 = smul.u32 32, %s14
      %p163 = scmp.lt.s32.totalorder %s162, 63
      %s164 = scalar_select %p163, %s162, 63
      %s165 = smul.addr %s164, 4
      %s166 = scalar_lea.vmem %s0, %s165
      %s167 = smul.u32 32, %s14
      %s168 = smul.u32 32, %s14
      %p169 = scmp.lt.s32.totalorder %s168, 63
      %s170 = scalar_select %p169, %s168, 63
      %s171 = smul.addr %s170, 8
      %s172 = scalar_lea.vmem %s3, %s171
      %s173 = smul.u32 32, %s14
      %v175 = vld [vmem:[%s166] sm:$0xf]
      %v176 = vld [vmem:[%s166 + $0x4] sm:$0xf]
      %v177 = vld [vmem:[%s166 + $0x8] sm:$0xf]
      %v178 = vld [vmem:[%s166 + $0xc] sm:$0xf]
      %v179 = vld [vmem:[%s166 + $0x10] sm:$0xf]
      %v180 = vld [vmem:[%s166 + $0x14] sm:$0xf]
      %v181 = vld [vmem:[%s166 + $0x18] sm:$0xf]
      %v182 = vld [vmem:[%s166 + $0x1c] sm:$0xf]
      %v183 = vld [vmem:[%s166 + $0x20] sm:$0xf]
      %v184 = vld [vmem:[%s166 + $0x24] sm:$0xf]
      %v185 = vld [vmem:[%s166 + $0x28] sm:$0xf]
      %v186 = vld [vmem:[%s166 + $0x2c] sm:$0xf]
      %v187 = vld [vmem:[%s166 + $0x30] sm:$0xf]
      %v188 = vld [vmem:[%s166 + $0x34] sm:$0xf]
      %v189 = vld [vmem:[%s166 + $0x38] sm:$0xf]
      %v190 = vld [vmem:[%s166 + $0x3c] sm:$0xf]
      %v191 = vld [vmem:[%s166 + $0x40] sm:$0xf]
      %v192 = vld [vmem:[%s166 + $0x44] sm:$0xf]
      %v193 = vld [vmem:[%s166 + $0x48] sm:$0xf]
      %v194 = vld [vmem:[%s166 + $0x4c] sm:$0xf]
      %v195 = vld [vmem:[%s166 + $0x50] sm:$0xf]
      %v196 = vld [vmem:[%s166 + $0x54] sm:$0xf]
      %v197 = vld [vmem:[%s166 + $0x58] sm:$0xf]
      %v198 = vld [vmem:[%s166 + $0x5c] sm:$0xf]
      %v199 = vld [vmem:[%s166 + $0x60] sm:$0xf]
      %v200 = vld [vmem:[%s166 + $0x64] sm:$0xf]
      %v201 = vld [vmem:[%s166 + $0x68] sm:$0xf]
      %v202 = vld [vmem:[%s166 + $0x6c] sm:$0xf]
      %v203 = vld [vmem:[%s166 + $0x70] sm:$0xf]
      %v204 = vld [vmem:[%s166 + $0x74] sm:$0xf]
      %v205 = vld [vmem:[%s166 + $0x78] sm:$0xf]
      %v206 = vld [vmem:[%s166 + $0x7c] sm:$0xf]
      %v207 = vld [vmem:[%s1] sm:$0xf]
      %v208 = vld [vmem:[%s1 + $0x4] sm:$0xf]
      %v209 = vld [vmem:[%s1 + $0x8] sm:$0xf]
      %v210 = vld [vmem:[%s1 + $0xc] sm:$0xf]
      %v211 = vld [vmem:[%s1 + $0x10] sm:$0xf]
      %v212 = vld [vmem:[%s1 + $0x14] sm:$0xf]
      %v213 = vld [vmem:[%s2] sm:$0x1]
      %v215 = vlaneseq
      %v216 = vshrl.u32 %v215, 7
      %v217 = vsub.s32 0, %v216
      %v218 = vrot.slane %v213, %v217
      %v252 = vunpack.c.l.b16 %v175
      %v253 = vunpack.c.l.b16 %v176
      %v254 = vunpack.c.l.b16 %v177
      %v255 = vunpack.c.l.b16 %v178
      %v256 = vunpack.c.l.b16 %v179
      %v257 = vunpack.c.l.b16 %v180
      %v258 = vunpack.c.l.b16 %v181
      %v259 = vunpack.c.l.b16 %v182
      %v260 = vunpack.c.l.b16 %v183
      %v261 = vunpack.c.l.b16 %v184
      %v262 = vunpack.c.l.b16 %v185
      %v263 = vunpack.c.l.b16 %v186
      %v264 = vunpack.c.l.b16 %v187
      %v265 = vunpack.c.l.b16 %v188
      %v266 = vunpack.c.l.b16 %v189
      %v267 = vunpack.c.l.b16 %v190
      %v268 = vunpack.c.l.b16 %v191
      %v269 = vunpack.c.l.b16 %v192
      %v270 = vunpack.c.l.b16 %v193
      %v271 = vunpack.c.l.b16 %v194
      %v272 = vunpack.c.l.b16 %v195
      %v273 = vunpack.c.l.b16 %v196
      %v274 = vunpack.c.l.b16 %v197
      %v275 = vunpack.c.l.b16 %v198
      %v276 = vunpack.c.l.b16 %v199
      %v277 = vunpack.c.l.b16 %v200
      %v278 = vunpack.c.l.b16 %v201
      %v279 = vunpack.c.l.b16 %v202
      %v280 = vunpack.c.l.b16 %v203
      %v281 = vunpack.c.l.b16 %v204
      %v282 = vunpack.c.l.b16 %v205
      %v283 = vunpack.c.l.b16 %v206
      %v284 = vpack.c.b16 %v253, %v252
      %v285 = vpack.c.b16 %v255, %v254
      %v286 = vpack.c.b16 %v257, %v256
      %v287 = vpack.c.b16 %v259, %v258
      %v288 = vpack.c.b16 %v261, %v260
      %v289 = vpack.c.b16 %v263, %v262
      %v290 = vpack.c.b16 %v265, %v264
      %v291 = vpack.c.b16 %v267, %v266
      %v292 = vpack.c.b16 %v269, %v268
      %v293 = vpack.c.b16 %v271, %v270
      %v294 = vpack.c.b16 %v273, %v272
      %v295 = vpack.c.b16 %v275, %v274
      %v296 = vpack.c.b16 %v277, %v276
      %v297 = vpack.c.b16 %v279, %v278
      %v298 = vpack.c.b16 %v281, %v280
      %v299 = vpack.c.b16 %v283, %v282
      %v306 = vunpack.c.l.b16 %v207
      %v307 = vunpack.c.l.b16 %v208
      %v308 = vunpack.c.l.b16 %v209
      %v309 = vunpack.c.l.b16 %v210
      %v310 = vunpack.c.l.b16 %v211
      %v311 = vunpack.c.l.b16 %v212
      %v312 = vpack.c.b16 %v307, %v306
      %v313 = vpack.c.b16 %v309, %v308
      %v314 = vpack.c.b16 %v311, %v310
      %vm318 = vcmask 392192
      %v320 = vsel %vm318, %v284, 0
      %v323 = vsel %vm318, %v285, 0
      %v326 = vsel %vm318, %v286, 0
      %v329 = vsel %vm318, %v287, 0
      %v332 = vsel %vm318, %v288, 0
      %v335 = vsel %vm318, %v289, 0
      %v338 = vsel %vm318, %v290, 0
      %v341 = vsel %vm318, %v291, 0
      %v344 = vsel %vm318, %v292, 0
      %v347 = vsel %vm318, %v293, 0
      %v350 = vsel %vm318, %v294, 0
      %v353 = vsel %vm318, %v295, 0
      %v356 = vsel %vm318, %v296, 0
      %v359 = vsel %vm318, %v297, 0
      %v362 = vsel %vm318, %v298, 0
      %v365 = vsel %vm318, %v299, 0
      %367 = vmatprep.subr.bf16.mxu0 0
      %368 = vmatpush1.bf16.msra.mxu0 %v312
      %369 = vmatprep.subr.bf16.mxu0 0
      %370 = vmatpush1.bf16.msra.mxu0 %v313
      %371 = vmatprep.subr.bf16.mxu0 0
      %372 = vmatpush1.bf16.msra.mxu0 %v314
      %373 = vmatprep.subr.bf16.mxu0 0
      %374 = vmatpush1.bf16.msra.mxu0 0
      %375 = vmatprep.subr.bf16.mxu0 0
      %376 = vmatpush1.bf16.msra.mxu0 0
      %377 = vmatprep.subr.bf16.mxu0 0
      %378 = vmatpush1.bf16.msra.mxu0 0
      %379 = vmatprep.subr.bf16.mxu0 0
      %380 = vmatpush1.bf16.msra.mxu0 0
      %381 = vmatprep.subr.bf16.mxu0 0
      %382 = vmatpush1.bf16.msra.mxu0 0
      %383 = vmatprep.subr.bf16.mxu0 0
      %384 = vmatpush1.bf16.msra.mxu0 0
      %385 = vmatprep.subr.bf16.mxu0 0
      %386 = vmatpush1.bf16.msra.mxu0 0
      %387 = vmatprep.subr.bf16.mxu0 0
      %388 = vmatpush1.bf16.msra.mxu0 0
      %389 = vmatprep.subr.bf16.mxu0 0
      %390 = vmatpush1.bf16.msra.mxu0 0
      %391 = vmatprep.subr.bf16.mxu0 0
      %392 = vmatpush1.bf16.msra.mxu0 0
      %393 = vmatprep.subr.bf16.mxu0 0
      %394 = vmatpush1.bf16.msra.mxu0 0
      %395 = vmatprep.subr.bf16.mxu0 0
      %396 = vmatpush1.bf16.msra.mxu0 0
      %397 = vmatprep.subr.bf16.mxu0 0
      %398 = vmatpush1.bf16.msra.mxu0 0
      %399 = vmatprep.mubr.bf16.mxu0 0
      %400 = vmatmul.mubr.bf16.gmra.mrb[0].mxu0 %v320
      %v401 = vpop.f32.mrb[0].mxu0
      %v402 = vadd.f32 %v218, %v401
      %v403 = vpop.f32.mrb[0].mxu0
      %v404 = vpop.f32.mrb[0].mxu0
      %v405 = vadd.f32 %v218, %v404
      %v406 = vpop.f32.mrb[0].mxu0
      %407 = vmatprep.mubr.bf16.mxu0 0
      %408 = vmatmul.mubr.bf16.gmra.mrb[0].mxu0 %v323
      %v409 = vpop.f32.mrb[0].mxu0
      %v410 = vadd.f32 %v218, %v409
      %v411 = vpop.f32.mrb[0].mxu0
      %v412 = vpop.f32.mrb[0].mxu0
      %v413 = vadd.f32 %v218, %v412
      %v414 = vpop.f32.mrb[0].mxu0
      %415 = vmatprep.mubr.bf16.mxu0 0
      %416 = vmatmul.mubr.bf16.gmra.mrb[0].mxu0 %v326
      %v417 = vpop.f32.mrb[0].mxu0
      %v418 = vadd.f32 %v218, %v417
      %v419 = vpop.f32.mrb[0].mxu0
      %v420 = vpop.f32.mrb[0].mxu0
      %v421 = vadd.f32 %v218, %v420
      %v422 = vpop.f32.mrb[0].mxu0
      %423 = vmatprep.mubr.bf16.mxu0 0
      %424 = vmatmul.mubr.bf16.gmra.mrb[0].mxu0 %v329
      %v425 = vpop.f32.mrb[0].mxu0
      %v426 = vadd.f32 %v218, %v425
      %v427 = vpop.f32.mrb[0].mxu0
      %v428 = vpop.f32.mrb[0].mxu0
      %v429 = vadd.f32 %v218, %v428
      %v430 = vpop.f32.mrb[0].mxu0
      %431 = vmatprep.mubr.bf16.mxu0 0
      %432 = vmatmul.mubr.bf16.gmra.mrb[0].mxu0 %v332
      %v433 = vpop.f32.mrb[0].mxu0
      %v434 = vadd.f32 %v218, %v433
      %v435 = vpop.f32.mrb[0].mxu0
      %v436 = vpop.f32.mrb[0].mxu0
      %v437 = vadd.f32 %v218, %v436
      %v438 = vpop.f32.mrb[0].mxu0
      %439 = vmatprep.mubr.bf16.mxu0 0
      %440 = vmatmul.mubr.bf16.gmra.mrb[0].mxu0 %v335
      %v441 = vpop.f32.mrb[0].mxu0
      %v442 = vadd.f32 %v218, %v441
      %v443 = vpop.f32.mrb[0].mxu0
      %v444 = vpop.f32.mrb[0].mxu0
      %v445 = vadd.f32 %v218, %v444
      %v446 = vpop.f32.mrb[0].mxu0
      %447 = vmatprep.mubr.bf16.mxu0 0
      %448 = vmatmul.mubr.bf16.gmra.mrb[0].mxu0 %v338
      %v449 = vpop.f32.mrb[0].mxu0
      %v450 = vadd.f32 %v218, %v449
      %v451 = vpop.f32.mrb[0].mxu0
      %v452 = vpop.f32.mrb[0].mxu0
      %v453 = vadd.f32 %v218, %v452
      %v454 = vpop.f32.mrb[0].mxu0
      %455 = vmatprep.mubr.bf16.mxu0 0
      %456 = vmatmul.mubr.bf16.gmra.mrb[0].mxu0 %v341
      %v457 = vpop.f32.mrb[0].mxu0
      %v458 = vadd.f32 %v218, %v457
      %v459 = vpop.f32.mrb[0].mxu0
      %v460 = vpop.f32.mrb[0].mxu0
      %v461 = vadd.f32 %v218, %v460
      %v462 = vpop.f32.mrb[0].mxu0
      %463 = vmatprep.mubr.bf16.mxu0 0
      %464 = vmatmul.mubr.bf16.gmra.mrb[0].mxu0 %v344
      %v465 = vpop.f32.mrb[0].mxu0
      %v466 = vadd.f32 %v218, %v465
      %v467 = vpop.f32.mrb[0].mxu0
      %v468 = vpop.f32.mrb[0].mxu0
      %v469 = vadd.f32 %v218, %v468
      %v470 = vpop.f32.mrb[0].mxu0
      %471 = vmatprep.mubr.bf16.mxu0 0
      %472 = vmatmul.mubr.bf16.gmra.mrb[0].mxu0 %v347
      %v473 = vpop.f32.mrb[0].mxu0
      %v474 = vadd.f32 %v218, %v473
      %v475 = vpop.f32.mrb[0].mxu0
      %v476 = vpop.f32.mrb[0].mxu0
      %v477 = vadd.f32 %v218, %v476
      %v478 = vpop.f32.mrb[0].mxu0
      %479 = vmatprep.mubr.bf16.mxu0 0
      %480 = vmatmul.mubr.bf16.gmra.mrb[0].mxu0 %v350
      %v481 = vpop.f32.mrb[0].mxu0
      %v482 = vadd.f32 %v218, %v481
      %v483 = vpop.f32.mrb[0].mxu0
      %v484 = vpop.f32.mrb[0].mxu0
      %v485 = vadd.f32 %v218, %v484
      %v486 = vpop.f32.mrb[0].mxu0
      %487 = vmatprep.mubr.bf16.mxu0 0
      %488 = vmatmul.mubr.bf16.gmra.mrb[0].mxu0 %v353
      %v489 = vpop.f32.mrb[0].mxu0
      %v490 = vadd.f32 %v218, %v489
      %v491 = vpop.f32.mrb[0].mxu0
      %v492 = vpop.f32.mrb[0].mxu0
      %v493 = vadd.f32 %v218, %v492
      %v494 = vpop.f32.mrb[0].mxu0
      %495 = vmatprep.mubr.bf16.mxu0 0
      %496 = vmatmul.mubr.bf16.gmra.mrb[0].mxu0 %v356
      %v497 = vpop.f32.mrb[0].mxu0
      %v498 = vadd.f32 %v218, %v497
      %v499 = vpop.f32.mrb[0].mxu0
      %v500 = vpop.f32.mrb[0].mxu0
      %v501 = vadd.f32 %v218, %v500
      %v502 = vpop.f32.mrb[0].mxu0
      %503 = vmatprep.mubr.bf16.mxu0 0
      %504 = vmatmul.mubr.bf16.gmra.mrb[0].mxu0 %v359
      %v505 = vpop.f32.mrb[0].mxu0
      %v506 = vadd.f32 %v218, %v505
      %v507 = vpop.f32.mrb[0].mxu0
      %v508 = vpop.f32.mrb[0].mxu0
      %v509 = vadd.f32 %v218, %v508
      %v510 = vpop.f32.mrb[0].mxu0
      %511 = vmatprep.mubr.bf16.mxu0 0
      %512 = vmatmul.mubr.bf16.gmra.mrb[0].mxu0 %v362
      %v513 = vpop.f32.mrb[0].mxu0
      %v514 = vadd.f32 %v218, %v513
      %v515 = vpop.f32.mrb[0].mxu0
      %v516 = vpop.f32.mrb[0].mxu0
      %v517 = vadd.f32 %v218, %v516
      %v518 = vpop.f32.mrb[0].mxu0
      %519 = vmatprep.mubr.bf16.mxu0 0
      %520 = vmatmul.mubr.bf16.gmra.mrb[0].mxu0 %v365
      %v521 = vpop.f32.mrb[0].mxu0
      %v522 = vadd.f32 %v218, %v521
      %v523 = vpop.f32.mrb[0].mxu0
      %v524 = vpop.f32.mrb[0].mxu0
      %v525 = vadd.f32 %v218, %v524
      %v526 = vpop.f32.mrb[0].mxu0
      %527 = vdwg.mxu0
      %vm528 = vcmp.ge.f32.partialorder %v402, 0.0
      %vm529 = vcmp.ge.f32.partialorder %v405, 0.0
      %vm530 = vcmp.ge.f32.partialorder %v410, 0.0
      %vm531 = vcmp.ge.f32.partialorder %v413, 0.0
      %vm532 = vcmp.ge.f32.partialorder %v418, 0.0
      %vm533 = vcmp.ge.f32.partialorder %v421, 0.0
      %vm534 = vcmp.ge.f32.partialorder %v426, 0.0
      %vm535 = vcmp.ge.f32.partialorder %v429, 0.0
      %vm536 = vcmp.ge.f32.partialorder %v434, 0.0
      %vm537 = vcmp.ge.f32.partialorder %v437, 0.0
      %vm538 = vcmp.ge.f32.partialorder %v442, 0.0
      %vm539 = vcmp.ge.f32.partialorder %v445, 0.0
      %vm540 = vcmp.ge.f32.partialorder %v450, 0.0
      %vm541 = vcmp.ge.f32.partialorder %v453, 0.0
      %vm542 = vcmp.ge.f32.partialorder %v458, 0.0
      %vm543 = vcmp.ge.f32.partialorder %v461, 0.0
      %vm544 = vcmp.ge.f32.partialorder %v466, 0.0
      %vm545 = vcmp.ge.f32.partialorder %v469, 0.0
      %vm546 = vcmp.ge.f32.partialorder %v474, 0.0
      %vm547 = vcmp.ge.f32.partialorder %v477, 0.0
      %vm548 = vcmp.ge.f32.partialorder %v482, 0.0
      %vm549 = vcmp.ge.f32.partialorder %v485, 0.0
      %vm550 = vcmp.ge.f32.partialorder %v490, 0.0
      %vm551 = vcmp.ge.f32.partialorder %v493, 0.0
      %vm552 = vcmp.ge.f32.partialorder %v498, 0.0
      %vm553 = vcmp.ge.f32.partialorder %v501, 0.0
      %vm554 = vcmp.ge.f32.partialorder %v506, 0.0
      %vm555 = vcmp.ge.f32.partialorder %v509, 0.0
      %vm556 = vcmp.ge.f32.partialorder %v514, 0.0
      %vm557 = vcmp.ge.f32.partialorder %v517, 0.0
      %vm558 = vcmp.ge.f32.partialorder %v522, 0.0
      %vm559 = vcmp.ge.f32.partialorder %v525, 0.0
      %v560 = vmul.f32 %v402, 0.2
      %v561 = vmul.f32 %v405, 0.2
      %v562 = vmul.f32 %v410, 0.2
      %v563 = vmul.f32 %v413, 0.2
      %v564 = vmul.f32 %v418, 0.2
      %v565 = vmul.f32 %v421, 0.2
      %v566 = vmul.f32 %v426, 0.2
      %v567 = vmul.f32 %v429, 0.2
      %v568 = vmul.f32 %v434, 0.2
      %v569 = vmul.f32 %v437, 0.2
      %v570 = vmul.f32 %v442, 0.2
      %v571 = vmul.f32 %v445, 0.2
      %v572 = vmul.f32 %v450, 0.2
      %v573 = vmul.f32 %v453, 0.2
      %v574 = vmul.f32 %v458, 0.2
      %v575 = vmul.f32 %v461, 0.2
      %v576 = vmul.f32 %v466, 0.2
      %v577 = vmul.f32 %v469, 0.2
      %v578 = vmul.f32 %v474, 0.2
      %v579 = vmul.f32 %v477, 0.2
      %v580 = vmul.f32 %v482, 0.2
      %v581 = vmul.f32 %v485, 0.2
      %v582 = vmul.f32 %v490, 0.2
      %v583 = vmul.f32 %v493, 0.2
      %v584 = vmul.f32 %v498, 0.2
      %v585 = vmul.f32 %v501, 0.2
      %v586 = vmul.f32 %v506, 0.2
      %v587 = vmul.f32 %v509, 0.2
      %v588 = vmul.f32 %v514, 0.2
      %v589 = vmul.f32 %v517, 0.2
      %v590 = vmul.f32 %v522, 0.2
      %v591 = vmul.f32 %v525, 0.2
      %v592 = vsel %vm528, %v402, %v560
      %v593 = vsel %vm529, %v405, %v561
      %v594 = vsel %vm530, %v410, %v562
      %v595 = vsel %vm531, %v413, %v563
      %v596 = vsel %vm532, %v418, %v564
      %v597 = vsel %vm533, %v421, %v565
      %v598 = vsel %vm534, %v426, %v566
      %v599 = vsel %vm535, %v429, %v567
      %v600 = vsel %vm536, %v434, %v568
      %v601 = vsel %vm537, %v437, %v569
      %v602 = vsel %vm538, %v442, %v570
      %v603 = vsel %vm539, %v445, %v571
      %v604 = vsel %vm540, %v450, %v572
      %v605 = vsel %vm541, %v453, %v573
      %v606 = vsel %vm542, %v458, %v574
      %v607 = vsel %vm543, %v461, %v575
      %v608 = vsel %vm544, %v466, %v576
      %v609 = vsel %vm545, %v469, %v577
      %v610 = vsel %vm546, %v474, %v578
      %v611 = vsel %vm547, %v477, %v579
      %v612 = vsel %vm548, %v482, %v580
      %v613 = vsel %vm549, %v485, %v581
      %v614 = vsel %vm550, %v490, %v582
      %v615 = vsel %vm551, %v493, %v583
      %v616 = vsel %vm552, %v498, %v584
      %v617 = vsel %vm553, %v501, %v585
      %v618 = vsel %vm554, %v506, %v586
      %v619 = vsel %vm555, %v509, %v587
      %v620 = vsel %vm556, %v514, %v588
      %v621 = vsel %vm557, %v517, %v589
      %v622 = vsel %vm558, %v522, %v590
      %v623 = vsel %vm559, %v525, %v591
      %vm624 = vcmask 64512
      %625 = vst.msk [vmem:[%s172] sm:$0xff] %vm624, %v592
      %626 = vst.msk [vmem:[%s172 + $0x8] sm:$0xff] %vm624, %v593
      %627 = vst.msk [vmem:[%s172 + $0x10] sm:$0xff] %vm624, %v594
      %628 = vst.msk [vmem:[%s172 + $0x18] sm:$0xff] %vm624, %v595
      %629 = vst.msk [vmem:[%s172 + $0x20] sm:$0xff] %vm624, %v596
      %630 = vst.msk [vmem:[%s172 + $0x28] sm:$0xff] %vm624, %v597
      %631 = vst.msk [vmem:[%s172 + $0x30] sm:$0xff] %vm624, %v598
      %632 = vst.msk [vmem:[%s172 + $0x38] sm:$0xff] %vm624, %v599
      %633 = vst.msk [vmem:[%s172 + $0x40] sm:$0xff] %vm624, %v600
      %634 = vst.msk [vmem:[%s172 + $0x48] sm:$0xff] %vm624, %v601
      %635 = vst.msk [vmem:[%s172 + $0x50] sm:$0xff] %vm624, %v602
      %636 = vst.msk [vmem:[%s172 + $0x58] sm:$0xff] %vm624, %v603
      %637 = vst.msk [vmem:[%s172 + $0x60] sm:$0xff] %vm624, %v604
      %638 = vst.msk [vmem:[%s172 + $0x68] sm:$0xff] %vm624, %v605
      %639 = vst.msk [vmem:[%s172 + $0x70] sm:$0xff] %vm624, %v606
      %640 = vst.msk [vmem:[%s172 + $0x78] sm:$0xff] %vm624, %v607
      %641 = vst.msk [vmem:[%s172 + $0x80] sm:$0xff] %vm624, %v608
      %642 = vst.msk [vmem:[%s172 + $0x88] sm:$0xff] %vm624, %v609
      %643 = vst.msk [vmem:[%s172 + $0x90] sm:$0xff] %vm624, %v610
      %644 = vst.msk [vmem:[%s172 + $0x98] sm:$0xff] %vm624, %v611
      %645 = vst.msk [vmem:[%s172 + $0xa0] sm:$0xff] %vm624, %v612
      %646 = vst.msk [vmem:[%s172 + $0xa8] sm:$0xff] %vm624, %v613
      %647 = vst.msk [vmem:[%s172 + $0xb0] sm:$0xff] %vm624, %v614
      %648 = vst.msk [vmem:[%s172 + $0xb8] sm:$0xff] %vm624, %v615
      %649 = vst.msk [vmem:[%s172 + $0xc0] sm:$0xff] %vm624, %v616
      %650 = vst.msk [vmem:[%s172 + $0xc8] sm:$0xff] %vm624, %v617
      %651 = vst.msk [vmem:[%s172 + $0xd0] sm:$0xff] %vm624, %v618
      %652 = vst.msk [vmem:[%s172 + $0xd8] sm:$0xff] %vm624, %v619
      %653 = vst.msk [vmem:[%s172 + $0xe0] sm:$0xff] %vm624, %v620
      %654 = vst.msk [vmem:[%s172 + $0xe8] sm:$0xff] %vm624, %v621
      %655 = vst.msk [vmem:[%s172 + $0xf0] sm:$0xff] %vm624, %v622
      %656 = vst.msk [vmem:[%s172 + $0xf8] sm:$0xff] %vm624, %v623
      %s657 = smul.u32 32, %s14
      %p658 = scmp.lt.s32.totalorder %s657, 63
      %s659 = scalar_select %p658, %s657, 63
      %s660 = smul.addr %s659, 8
      %s661 = scalar_lea.vmem %s3, %s660
      // Predicated region
      $region33: #{image_embedding_forward.4} parent=31 // pred_check
        %p662 = pneg %p100
      $region34: #{image_embedding_forward.4} parent=31 // pred_check_branch
        %664 = sbr.rel (%p662) target = $region36
      $region35: #{image_embedding_forward.4} parent=31 // pred_region
        %s665 = smul.u32 32, %s14
      $region36: #{image_embedding_forward.4} parent=31 // pred_fallthru
        _
    $region32: #{image_embedding_forward.4} parent=5 // pred_fallthru
      _
    %p666 = scmp.le.s32.totalorder 2, %s9
    // Predicated region
    $region37: #{image_embedding_forward.4} parent=5 // pred_check
      %p667 = pneg %p666
    $region38: #{image_embedding_forward.4} parent=5 // pred_check_branch
      %669 = sbr.rel (%p667) target = $region40
    $region39: #{image_embedding_forward.4} parent=5 // pred_region
      %s670 = ssub.s32 %s9, 2
      // Predicated region
      $region41: #{image_embedding_forward.4} parent=39 // pred_check
        %p671 = pneg %p106
      $region42: #{image_embedding_forward.4} parent=39 // pred_check_branch
        %673 = sbr.rel (%p671) target = $region44
      $region43: #{image_embedding_forward.4} parent=39 // pred_region
        %s674 = smul.u32 32, %s15
        %p675 = scmp.lt.s32.totalorder %s674, 63
        %s676 = scalar_select %p675, %s674, 63
        %s677 = smul.addr %s676, 8
        %s678 = scalar_lea.vmem %s3, %s677
      $region44: #{image_embedding_forward.4} parent=39 // pred_fallthru
        _
    $region40: #{image_embedding_forward.4} parent=5 // pred_fallthru
      _
  $region6: #{image_embedding_forward.4} parent=0 // loop_footer
    %s13 = sadd.s32 1, %s9
  $region7: #{image_embedding_forward.4} parent=0 // loop_footer_branch
    %8 = sbr.rel target = $region3
  $region8: #{image_embedding_forward.4} parent=0 // loop_exit
    _

// kernel: image_embedding_forward.5
$region0: #{image_embedding_forward.5}
  #allocation0 [shape = 'u32[]', space=smem, size = 0x4, offset = 0x4, fixed_abs, tag = 'smem constant byte address 0x4 - core index']
  #allocation1 [shape = 'u32[144,128]{1,0:T(1,128)}', space=vmem, size = 0x12000, scoped, tag = 'internal scratch']
  %s0 = inlined_call_operand.vmem [shape: bf16[128,128], index: 0, kind: input, shape index: {}]
  %s1 = inlined_call_operand.vmem [shape: bf16[128,16], index: 1, kind: input, shape index: {}]
  %s2 = inlined_call_operand.vmem [shape: f32[1,16], index: 2, kind: input, shape index: {}]
  %s3 = inlined_call_operand.vmem [shape: f32[128,16], index: 3, kind: output, shape index: {}]
  %s4 = sld [smem:[#allocation0]]
  $region22: #{image_embedding_forward.5} parent=0
    _
  %s6 = ssub.s32 1, %s4
  %s7 = scalar_select 0, %s6, %s4
  // Predicated region
  $region2: #{image_embedding_forward.5} parent=0 // pred_check
    _
  $region3: #{image_embedding_forward.5} parent=0 // pred_check_branch
    %9 = sbr.rel (0) target = $region5
  $region4: #{image_embedding_forward.5} parent=0 // pred_region
    _
  $region5: #{image_embedding_forward.5} parent=0 // pred_fallthru
    _
  // Predicated region
  $region6: #{image_embedding_forward.5} parent=0 // pred_check
    _
  $region7: #{image_embedding_forward.5} parent=0 // pred_check_branch
    %11 = sbr.rel (0) target = $region9
  $region8: #{image_embedding_forward.5} parent=0 // pred_region
    _
  $region9: #{image_embedding_forward.5} parent=0 // pred_fallthru
    _
  // Predicated region
  $region10: #{image_embedding_forward.5} parent=0 // pred_check
    _
  $region11: #{image_embedding_forward.5} parent=0 // pred_check_branch
    %13 = sbr.rel (0) target = $region13
  $region12: #{image_embedding_forward.5} parent=0 // pred_region
    _
  $region13: #{image_embedding_forward.5} parent=0 // pred_fallthru
    _
  %v15 = vld [vmem:[%s0] sm:$0xf]
  %v16 = vld [vmem:[%s0 + $0x4] sm:$0xf]
  %v17 = vld [vmem:[%s0 + $0x8] sm:$0xf]
  %v18 = vld [vmem:[%s0 + $0xc] sm:$0xf]
  %v19 = vld [vmem:[%s0 + $0x10] sm:$0xf]
  %v20 = vld [vmem:[%s0 + $0x14] sm:$0xf]
  %v21 = vld [vmem:[%s0 + $0x18] sm:$0xf]
  %v22 = vld [vmem:[%s0 + $0x1c] sm:$0xf]
  %v23 = vld [vmem:[%s0 + $0x20] sm:$0xf]
  %v24 = vld [vmem:[%s0 + $0x24] sm:$0xf]
  %v25 = vld [vmem:[%s0 + $0x28] sm:$0xf]
  %v26 = vld [vmem:[%s0 + $0x2c] sm:$0xf]
  %v27 = vld [vmem:[%s0 + $0x30] sm:$0xf]
  %v28 = vld [vmem:[%s0 + $0x34] sm:$0xf]
  %v29 = vld [vmem:[%s0 + $0x38] sm:$0xf]
  %v30 = vld [vmem:[%s0 + $0x3c] sm:$0xf]
  %v31 = vld [vmem:[%s1] sm:$0xf]
  %v32 = vld [vmem:[%s1 + $0x4] sm:$0xf]
  %v33 = vld [vmem:[%s1 + $0x8] sm:$0xf]
  %v34 = vld [vmem:[%s1 + $0xc] sm:$0xf]
  %v35 = vld [vmem:[%s1 + $0x10] sm:$0xf]
  %v36 = vld [vmem:[%s1 + $0x14] sm:$0xf]
  %v37 = vld [vmem:[%s1 + $0x18] sm:$0xf]
  %v38 = vld [vmem:[%s1 + $0x1c] sm:$0xf]
  %v39 = vld [vmem:[%s1 + $0x20] sm:$0xf]
  %v40 = vld [vmem:[%s1 + $0x24] sm:$0xf]
  %v41 = vld [vmem:[%s1 + $0x28] sm:$0xf]
  %v42 = vld [vmem:[%s1 + $0x2c] sm:$0xf]
  %v43 = vld [vmem:[%s1 + $0x30] sm:$0xf]
  %v44 = vld [vmem:[%s1 + $0x34] sm:$0xf]
  %v45 = vld [vmem:[%s1 + $0x38] sm:$0xf]
  %v46 = vld [vmem:[%s1 + $0x3c] sm:$0xf]
  %v47 = vld [vmem:[%s2] sm:$0x1]
  %v49 = vlaneseq
  %v50 = vshrl.u32 %v49, 7
  %v51 = vsub.s32 0, %v50
  %v52 = vrot.slane %v47, %v51
  %v70 = vunpack.c.l.b16 %v15
  %v71 = vunpack.c.l.b16 %v16
  %v72 = vunpack.c.l.b16 %v17
  %v73 = vunpack.c.l.b16 %v18
  %v74 = vunpack.c.l.b16 %v19
  %v75 = vunpack.c.l.b16 %v20
  %v76 = vunpack.c.l.b16 %v21
  %v77 = vunpack.c.l.b16 %v22
  %v78 = vunpack.c.l.b16 %v23
  %v79 = vunpack.c.l.b16 %v24
  %v80 = vunpack.c.l.b16 %v25
  %v81 = vunpack.c.l.b16 %v26
  %v82 = vunpack.c.l.b16 %v27
  %v83 = vunpack.c.l.b16 %v28
  %v84 = vunpack.c.l.b16 %v29
  %v85 = vunpack.c.l.b16 %v30
  %v86 = vpack.c.b16 %v71, %v70
  %v87 = vpack.c.b16 %v73, %v72
  %v88 = vpack.c.b16 %v75, %v74
  %v89 = vpack.c.b16 %v77, %v76
  %v90 = vpack.c.b16 %v79, %v78
  %v91 = vpack.c.b16 %v81, %v80
  %v92 = vpack.c.b16 %v83, %v82
  %v93 = vpack.c.b16 %v85, %v84
  %v118 = vunpack.c.l.b16 %v31
  %v119 = vunpack.c.l.b16 %v32
  %v120 = vunpack.c.l.b16 %v33
  %v121 = vunpack.c.l.b16 %v34
  %v122 = vunpack.c.l.b16 %v35
  %v123 = vunpack.c.l.b16 %v36
  %v124 = vunpack.c.l.b16 %v37
  %v125 = vunpack.c.l.b16 %v38
  %v126 = vunpack.c.l.b16 %v39
  %v127 = vunpack.c.l.b16 %v40
  %v128 = vunpack.c.l.b16 %v41
  %v129 = vunpack.c.l.b16 %v42
  %v130 = vunpack.c.l.b16 %v43
  %v131 = vunpack.c.l.b16 %v44
  %v132 = vunpack.c.l.b16 %v45
  %v133 = vunpack.c.l.b16 %v46
  %v134 = vpack.c.b16 %v119, %v118
  %v135 = vpack.c.b16 %v121, %v120
  %v136 = vpack.c.b16 %v123, %v122
  %v137 = vpack.c.b16 %v125, %v124
  %v138 = vpack.c.b16 %v127, %v126
  %v139 = vpack.c.b16 %v129, %v128
  %v140 = vpack.c.b16 %v131, %v130
  %v141 = vpack.c.b16 %v133, %v132
  %150 = vmatprep.subr.bf16.mxu0 0
  %151 = vmatpush1.bf16.msra.mxu0 %v134
  %152 = vmatprep.subr.bf16.mxu0 0
  %153 = vmatpush1.bf16.msra.mxu0 %v135
  %154 = vmatprep.subr.bf16.mxu0 0
  %155 = vmatpush1.bf16.msra.mxu0 %v136
  %156 = vmatprep.subr.bf16.mxu0 0
  %157 = vmatpush1.bf16.msra.mxu0 %v137
  %158 = vmatprep.subr.bf16.mxu0 0
  %159 = vmatpush1.bf16.msra.mxu0 %v138
  %160 = vmatprep.subr.bf16.mxu0 0
  %161 = vmatpush1.bf16.msra.mxu0 %v139
  %162 = vmatprep.subr.bf16.mxu0 0
  %163 = vmatpush1.bf16.msra.mxu0 %v140
  %164 = vmatprep.subr.bf16.mxu0 0
  %165 = vmatpush1.bf16.msra.mxu0 %v141
  %166 = vmatprep.subr.bf16.mxu0 0
  %167 = vmatpush1.bf16.msra.mxu0 0
  %168 = vmatprep.subr.bf16.mxu0 0
  %169 = vmatpush1.bf16.msra.mxu0 0
  %170 = vmatprep.subr.bf16.mxu0 0
  %171 = vmatpush1.bf16.msra.mxu0 0
  %172 = vmatprep.subr.bf16.mxu0 0
  %173 = vmatpush1.bf16.msra.mxu0 0
  %174 = vmatprep.subr.bf16.mxu0 0
  %175 = vmatpush1.bf16.msra.mxu0 0
  %176 = vmatprep.subr.bf16.mxu0 0
  %177 = vmatpush1.bf16.msra.mxu0 0
  %178 = vmatprep.subr.bf16.mxu0 0
  %179 = vmatpush1.bf16.msra.mxu0 0
  %180 = vmatprep.subr.bf16.mxu0 0
  %181 = vmatpush1.bf16.msra.mxu0 0
  %182 = vmatprep.mubr.bf16.mxu0 0
  %183 = vmatmul.mubr.bf16.gmra.mrb[0].mxu0 %v86
  %v184 = vpop.f32.mrb[0].mxu0
  %v185 = vadd.f32 %v52, %v184
  %v186 = vpop.f32.mrb[0].mxu0
  %v187 = vpop.f32.mrb[0].mxu0
  %v188 = vadd.f32 %v52, %v187
  %v189 = vpop.f32.mrb[0].mxu0
  %190 = vmatprep.mubr.bf16.mxu0 0
  %191 = vmatmul.mubr.bf16.gmra.mrb[0].mxu0 %v87
  %v192 = vpop.f32.mrb[0].mxu0
  %v193 = vadd.f32 %v52, %v192
  %v194 = vpop.f32.mrb[0].mxu0
  %v195 = vpop.f32.mrb[0].mxu0
  %v196 = vadd.f32 %v52, %v195
  %v197 = vpop.f32.mrb[0].mxu0
  %198 = vmatprep.mubr.bf16.mxu0 0
  %199 = vmatmul.mubr.bf16.gmra.mrb[0].mxu0 %v88
  %v200 = vpop.f32.mrb[0].mxu0
  %v201 = vadd.f32 %v52, %v200
  %v202 = vpop.f32.mrb[0].mxu0
  %v203 = vpop.f32.mrb[0].mxu0
  %v204 = vadd.f32 %v52, %v203
  %v205 = vpop.f32.mrb[0].mxu0
  %206 = vmatprep.mubr.bf16.mxu0 0
  %207 = vmatmul.mubr.bf16.gmra.mrb[0].mxu0 %v89
  %v208 = vpop.f32.mrb[0].mxu0
  %v209 = vadd.f32 %v52, %v208
  %v210 = vpop.f32.mrb[0].mxu0
  %v211 = vpop.f32.mrb[0].mxu0
  %v212 = vadd.f32 %v52, %v211
  %v213 = vpop.f32.mrb[0].mxu0
  %214 = vmatprep.mubr.bf16.mxu0 0
  %215 = vmatmul.mubr.bf16.gmra.mrb[0].mxu0 %v90
  %v216 = vpop.f32.mrb[0].mxu0
  %v217 = vadd.f32 %v52, %v216
  %v218 = vpop.f32.mrb[0].mxu0
  %v219 = vpop.f32.mrb[0].mxu0
  %v220 = vadd.f32 %v52, %v219
  %v221 = vpop.f32.mrb[0].mxu0
  %222 = vmatprep.mubr.bf16.mxu0 0
  %223 = vmatmul.mubr.bf16.gmra.mrb[0].mxu0 %v91
  %v224 = vpop.f32.mrb[0].mxu0
  %v225 = vadd.f32 %v52, %v224
  %v226 = vpop.f32.mrb[0].mxu0
  %v227 = vpop.f32.mrb[0].mxu0
  %v228 = vadd.f32 %v52, %v227
  %v229 = vpop.f32.mrb[0].mxu0
  %230 = vmatprep.mubr.bf16.mxu0 0
  %231 = vmatmul.mubr.bf16.gmra.mrb[0].mxu0 %v92
  %v232 = vpop.f32.mrb[0].mxu0
  %v233 = vadd.f32 %v52, %v232
  %v234 = vpop.f32.mrb[0].mxu0
  %v235 = vpop.f32.mrb[0].mxu0
  %v236 = vadd.f32 %v52, %v235
  %v237 = vpop.f32.mrb[0].mxu0
  %238 = vmatprep.mubr.bf16.mxu0 0
  %239 = vmatmul.mubr.bf16.gmra.mrb[0].mxu0 %v93
  %v240 = vpop.f32.mrb[0].mxu0
  %v241 = vadd.f32 %v52, %v240
  %v242 = vpop.f32.mrb[0].mxu0
  %v243 = vpop.f32.mrb[0].mxu0
  %v244 = vadd.f32 %v52, %v243
  %v245 = vpop.f32.mrb[0].mxu0
  %246 = vdwg.mxu0
  %vm247 = vcmp.ge.f32.partialorder %v185, 0.0
  %vm248 = vcmp.ge.f32.partialorder %v188, 0.0
  %vm249 = vcmp.ge.f32.partialorder %v193, 0.0
  %vm250 = vcmp.ge.f32.partialorder %v196, 0.0
  %vm251 = vcmp.ge.f32.partialorder %v201, 0.0
  %vm252 = vcmp.ge.f32.partialorder %v204, 0.0
  %vm253 = vcmp.ge.f32.partialorder %v209, 0.0
  %vm254 = vcmp.ge.f32.partialorder %v212, 0.0
  %vm255 = vcmp.ge.f32.partialorder %v217, 0.0
  %vm256 = vcmp.ge.f32.partialorder %v220, 0.0
  %vm257 = vcmp.ge.f32.partialorder %v225, 0.0
  %vm258 = vcmp.ge.f32.partialorder %v228, 0.0
  %vm259 = vcmp.ge.f32.partialorder %v233, 0.0
  %vm260 = vcmp.ge.f32.partialorder %v236, 0.0
  %vm261 = vcmp.ge.f32.partialorder %v241, 0.0
  %vm262 = vcmp.ge.f32.partialorder %v244, 0.0
  %v263 = vmul.f32 %v185, 0.2
  %v264 = vmul.f32 %v188, 0.2
  %v265 = vmul.f32 %v193, 0.2
  %v266 = vmul.f32 %v196, 0.2
  %v267 = vmul.f32 %v201, 0.2
  %v268 = vmul.f32 %v204, 0.2
  %v269 = vmul.f32 %v209, 0.2
  %v270 = vmul.f32 %v212, 0.2
  %v271 = vmul.f32 %v217, 0.2
  %v272 = vmul.f32 %v220, 0.2
  %v273 = vmul.f32 %v225, 0.2
  %v274 = vmul.f32 %v228, 0.2
  %v275 = vmul.f32 %v233, 0.2
  %v276 = vmul.f32 %v236, 0.2
  %v277 = vmul.f32 %v241, 0.2
  %v278 = vmul.f32 %v244, 0.2
  %v279 = vsel %vm247, %v185, %v263
  %v280 = vsel %vm248, %v188, %v264
  %v281 = vsel %vm249, %v193, %v265
  %v282 = vsel %vm250, %v196, %v266
  %v283 = vsel %vm251, %v201, %v267
  %v284 = vsel %vm252, %v204, %v268
  %v285 = vsel %vm253, %v209, %v269
  %v286 = vsel %vm254, %v212, %v270
  %v287 = vsel %vm255, %v217, %v271
  %v288 = vsel %vm256, %v220, %v272
  %v289 = vsel %vm257, %v225, %v273
  %v290 = vsel %vm258, %v228, %v274
  %v291 = vsel %vm259, %v233, %v275
  %v292 = vsel %vm260, %v236, %v276
  %v293 = vsel %vm261, %v241, %v277
  %v294 = vsel %vm262, %v244, %v278
  %vm295 = vcmask 130048
  %296 = vst.msk [vmem:[%s3] sm:$0xff] %vm295, %v279
  %297 = vst.msk [vmem:[%s3 + $0x8] sm:$0xff] %vm295, %v280
  %298 = vst.msk [vmem:[%s3 + $0x10] sm:$0xff] %vm295, %v281
  %299 = vst.msk [vmem:[%s3 + $0x18] sm:$0xff] %vm295, %v282
  %300 = vst.msk [vmem:[%s3 + $0x20] sm:$0xff] %vm295, %v283
  %301 = vst.msk [vmem:[%s3 + $0x28] sm:$0xff] %vm295, %v284
  %302 = vst.msk [vmem:[%s3 + $0x30] sm:$0xff] %vm295, %v285
  %303 = vst.msk [vmem:[%s3 + $0x38] sm:$0xff] %vm295, %v286
  %304 = vst.msk [vmem:[%s3 + $0x40] sm:$0xff] %vm295, %v287
  %305 = vst.msk [vmem:[%s3 + $0x48] sm:$0xff] %vm295, %v288
  %306 = vst.msk [vmem:[%s3 + $0x50] sm:$0xff] %vm295, %v289
  %307 = vst.msk [vmem:[%s3 + $0x58] sm:$0xff] %vm295, %v290
  %308 = vst.msk [vmem:[%s3 + $0x60] sm:$0xff] %vm295, %v291
  %309 = vst.msk [vmem:[%s3 + $0x68] sm:$0xff] %vm295, %v292
  %310 = vst.msk [vmem:[%s3 + $0x70] sm:$0xff] %vm295, %v293
  %311 = vst.msk [vmem:[%s3 + $0x78] sm:$0xff] %vm295, %v294
  // Predicated region
  $region14: #{image_embedding_forward.5} parent=0 // pred_check
    _
  $region15: #{image_embedding_forward.5} parent=0 // pred_check_branch
    %313 = sbr.rel (0) target = $region17
  $region16: #{image_embedding_forward.5} parent=0 // pred_region
    _
  $region17: #{image_embedding_forward.5} parent=0 // pred_fallthru
    _
  // Predicated region
  $region18: #{image_embedding_forward.5} parent=0 // pred_check
    _
  $region19: #{image_embedding_forward.5} parent=0 // pred_check_branch
    %315 = sbr.rel (0) target = $region21
  $region20: #{image_embedding_forward.5} parent=0 // pred_region
    _
  $region21: #{image_embedding_forward.5} parent=0 // pred_fallthru
    _

// kernel: image_embedding_forward.6
$region0: #{image_embedding_forward.6}
  #allocation0 [shape = 'u32[]', space=smem, size = 0x4, offset = 0x4, fixed_abs, tag = 'smem constant byte address 0x4 - core index']
  #allocation1 [shape = 'u32[144,128]{1,0:T(1,128)}', space=vmem, size = 0x12000, scoped, tag = 'internal scratch']
  %s0 = inlined_call_operand.vmem [shape: bf16[32,256], index: 0, kind: input, shape index: {}]
  %s1 = inlined_call_operand.vmem [shape: bf16[256,32], index: 1, kind: input, shape index: {}]
  %s2 = inlined_call_operand.vmem [shape: f32[1,32], index: 2, kind: input, shape index: {}]
  %s3 = inlined_call_operand.vmem [shape: f32[32,32], index: 3, kind: output, shape index: {}]
  %s4 = sld [smem:[#allocation0]]
  $region22: #{image_embedding_forward.6} parent=0
    _
  %s6 = ssub.s32 1, %s4
  %s7 = scalar_select 0, %s6, %s4
  // Predicated region
  $region2: #{image_embedding_forward.6} parent=0 // pred_check
    _
  $region3: #{image_embedding_forward.6} parent=0 // pred_check_branch
    %9 = sbr.rel (0) target = $region5
  $region4: #{image_embedding_forward.6} parent=0 // pred_region
    _
  $region5: #{image_embedding_forward.6} parent=0 // pred_fallthru
    _
  // Predicated region
  $region6: #{image_embedding_forward.6} parent=0 // pred_check
    _
  $region7: #{image_embedding_forward.6} parent=0 // pred_check_branch
    %11 = sbr.rel (0) target = $region9
  $region8: #{image_embedding_forward.6} parent=0 // pred_region
    _
  $region9: #{image_embedding_forward.6} parent=0 // pred_fallthru
    _
  // Predicated region
  $region10: #{image_embedding_forward.6} parent=0 // pred_check
    _
  $region11: #{image_embedding_forward.6} parent=0 // pred_check_branch
    %13 = sbr.rel (0) target = $region13
  $region12: #{image_embedding_forward.6} parent=0 // pred_region
    _
  $region13: #{image_embedding_forward.6} parent=0 // pred_fallthru
    _
  %v15 = vld [vmem:[%s0] sm:$0xff]
  %v16 = vld [vmem:[%s0 + $0x8] sm:$0xff]
  %v17 = vld [vmem:[%s0 + $0x10] sm:$0xff]
  %v18 = vld [vmem:[%s0 + $0x18] sm:$0xff]
  %v19 = vld [vmem:[%s1] sm:$0xf]
  %v20 = vld [vmem:[%s1 + $0x4] sm:$0xf]
  %v21 = vld [vmem:[%s1 + $0x8] sm:$0xf]
  %v22 = vld [vmem:[%s1 + $0xc] sm:$0xf]
  %v23 = vld [vmem:[%s1 + $0x10] sm:$0xf]
  %v24 = vld [vmem:[%s1 + $0x14] sm:$0xf]
  %v25 = vld [vmem:[%s1 + $0x18] sm:$0xf]
  %v26 = vld [vmem:[%s1 + $0x1c] sm:$0xf]
  %v27 = vld [vmem:[%s1 + $0x20] sm:$0xf]
  %v28 = vld [vmem:[%s1 + $0x24] sm:$0xf]
  %v29 = vld [vmem:[%s1 + $0x28] sm:$0xf]
  %v30 = vld [vmem:[%s1 + $0x2c] sm:$0xf]
  %v31 = vld [vmem:[%s1 + $0x30] sm:$0xf]
  %v32 = vld [vmem:[%s1 + $0x34] sm:$0xf]
  %v33 = vld [vmem:[%s1 + $0x38] sm:$0xf]
  %v34 = vld [vmem:[%s1 + $0x3c] sm:$0xf]
  %v35 = vld [vmem:[%s1 + $0x40] sm:$0xf]
  %v36 = vld [vmem:[%s1 + $0x44] sm:$0xf]
  %v37 = vld [vmem:[%s1 + $0x48] sm:$0xf]
  %v38 = vld [vmem:[%s1 + $0x4c] sm:$0xf]
  %v39 = vld [vmem:[%s1 + $0x50] sm:$0xf]
  %v40 = vld [vmem:[%s1 + $0x54] sm:$0xf]
  %v41 = vld [vmem:[%s1 + $0x58] sm:$0xf]
  %v42 = vld [vmem:[%s1 + $0x5c] sm:$0xf]
  %v43 = vld [vmem:[%s1 + $0x60] sm:$0xf]
  %v44 = vld [vmem:[%s1 + $0x64] sm:$0xf]
  %v45 = vld [vmem:[%s1 + $0x68] sm:$0xf]
  %v46 = vld [vmem:[%s1 + $0x6c] sm:$0xf]
  %v47 = vld [vmem:[%s1 + $0x70] sm:$0xf]
  %v48 = vld [vmem:[%s1 + $0x74] sm:$0xf]
  %v49 = vld [vmem:[%s1 + $0x78] sm:$0xf]
  %v50 = vld [vmem:[%s1 + $0x7c] sm:$0xf]
  %v51 = vld [vmem:[%s2] sm:$0x1]
  %v53 = vlaneseq
  %v54 = vshrl.u32 %v53, 7
  %v55 = vsub.s32 0, %v54
  %v56 = vrot.slane %v51, %v55
  %v62 = vunpack.c.l.b16 %v15
  %v63 = vunpack.c.h.b16 %v15
  %v64 = vunpack.c.l.b16 %v16
  %v65 = vunpack.c.h.b16 %v16
  %v66 = vunpack.c.l.b16 %v17
  %v67 = vunpack.c.h.b16 %v17
  %v68 = vunpack.c.l.b16 %v18
  %v69 = vunpack.c.h.b16 %v18
  %v70 = vpack.c.b16 %v64, %v62
  %v71 = vpack.c.b16 %v65, %v63
  %v72 = vpack.c.b16 %v68, %v66
  %v73 = vpack.c.b16 %v69, %v67
  %v110 = vunpack.c.l.b16 %v19
  %v111 = vunpack.c.l.b16 %v20
  %v112 = vunpack.c.l.b16 %v21
  %v113 = vunpack.c.l.b16 %v22
  %v114 = vunpack.c.l.b16 %v23
  %v115 = vunpack.c.l.b16 %v24
  %v116 = vunpack.c.l.b16 %v25
  %v117 = vunpack.c.l.b16 %v26
  %v118 = vunpack.c.l.b16 %v27
  %v119 = vunpack.c.l.b16 %v28
  %v120 = vunpack.c.l.b16 %v29
  %v121 = vunpack.c.l.b16 %v30
  %v122 = vunpack.c.l.b16 %v31
  %v123 = vunpack.c.l.b16 %v32
  %v124 = vunpack.c.l.b16 %v33
  %v125 = vunpack.c.l.b16 %v34
  %v126 = vunpack.c.l.b16 %v35
  %v127 = vunpack.c.l.b16 %v36
  %v128 = vunpack.c.l.b16 %v37
  %v129 = vunpack.c.l.b16 %v38
  %v130 = vunpack.c.l.b16 %v39
  %v131 = vunpack.c.l.b16 %v40
  %v132 = vunpack.c.l.b16 %v41
  %v133 = vunpack.c.l.b16 %v42
  %v134 = vunpack.c.l.b16 %v43
  %v135 = vunpack.c.l.b16 %v44
  %v136 = vunpack.c.l.b16 %v45
  %v137 = vunpack.c.l.b16 %v46
  %v138 = vunpack.c.l.b16 %v47
  %v139 = vunpack.c.l.b16 %v48
  %v140 = vunpack.c.l.b16 %v49
  %v141 = vunpack.c.l.b16 %v50
  %v142 = vpack.c.b16 %v111, %v110
  %v143 = vpack.c.b16 %v113, %v112
  %v144 = vpack.c.b16 %v115, %v114
  %v145 = vpack.c.b16 %v117, %v116
  %v146 = vpack.c.b16 %v119, %v118
  %v147 = vpack.c.b16 %v121, %v120
  %v148 = vpack.c.b16 %v123, %v122
  %v149 = vpack.c.b16 %v125, %v124
  %v150 = vpack.c.b16 %v127, %v126
  %v151 = vpack.c.b16 %v129, %v128
  %v152 = vpack.c.b16 %v131, %v130
  %v153 = vpack.c.b16 %v133, %v132
  %v154 = vpack.c.b16 %v135, %v134
  %v155 = vpack.c.b16 %v137, %v136
  %v156 = vpack.c.b16 %v139, %v138
  %v157 = vpack.c.b16 %v141, %v140
  %174 = vmatprep.subr.bf16.mxu0 0
  %175 = vmatpush1.bf16.msra.mxu0 %v142
  %176 = vmatprep.subr.bf16.mxu0 0
  %177 = vmatpush1.bf16.msra.mxu0 %v143
  %178 = vmatprep.subr.bf16.mxu0 0
  %179 = vmatpush1.bf16.msra.mxu0 %v144
  %180 = vmatprep.subr.bf16.mxu0 0
  %181 = vmatpush1.bf16.msra.mxu0 %v145
  %182 = vmatprep.subr.bf16.mxu0 0
  %183 = vmatpush1.bf16.msra.mxu0 %v146
  %184 = vmatprep.subr.bf16.mxu0 0
  %185 = vmatpush1.bf16.msra.mxu0 %v147
  %186 = vmatprep.subr.bf16.mxu0 0
  %187 = vmatpush1.bf16.msra.mxu0 %v148
  %188 = vmatprep.subr.bf16.mxu0 0
  %189 = vmatpush1.bf16.msra.mxu0 %v149
  %190 = vmatprep.subr.bf16.mxu0 0
  %191 = vmatpush1.bf16.msra.mxu0 %v150
  %192 = vmatprep.subr.bf16.mxu0 0
  %193 = vmatpush1.bf16.msra.mxu0 %v151
  %194 = vmatprep.subr.bf16.mxu0 0
  %195 = vmatpush1.bf16.msra.mxu0 %v152
  %196 = vmatprep.subr.bf16.mxu0 0
  %197 = vmatpush1.bf16.msra.mxu0 %v153
  %198 = vmatprep.subr.bf16.mxu0 0
  %199 = vmatpush1.bf16.msra.mxu0 %v154
  %200 = vmatprep.subr.bf16.mxu0 0
  %201 = vmatpush1.bf16.msra.mxu0 %v155
  %202 = vmatprep.subr.bf16.mxu0 0
  %203 = vmatpush1.bf16.msra.mxu0 %v156
  %204 = vmatprep.subr.bf16.mxu0 0
  %205 = vmatpush1.bf16.msra.mxu0 %v157
  %206 = vmatprep.mubr.bf16.mxu0 %v71
  %207 = vmatmul.mubr.bf16.gmra.mrb[0].mxu0 %v70
  %v208 = vpop.f32.mrb[0].mxu0
  %v209 = vadd.f32 %v56, %v208
  %v210 = vpop.f32.mrb[0].mxu0
  %v211 = vpop.f32.mrb[0].mxu0
  %v212 = vadd.f32 %v56, %v211
  %v213 = vpop.f32.mrb[0].mxu0
  %214 = vmatprep.mubr.bf16.mxu0 %v73
  %215 = vmatmul.mubr.bf16.gmra.mrb[0].mxu0 %v72
  %v216 = vpop.f32.mrb[0].mxu0
  %v217 = vadd.f32 %v56, %v216
  %v218 = vpop.f32.mrb[0].mxu0
  %v219 = vpop.f32.mrb[0].mxu0
  %v220 = vadd.f32 %v56, %v219
  %v221 = vpop.f32.mrb[0].mxu0
  %222 = vdwg.mxu0
  %vm223 = vcmp.ge.f32.partialorder %v209, 0.0
  %vm224 = vcmp.ge.f32.partialorder %v212, 0.0
  %vm225 = vcmp.ge.f32.partialorder %v217, 0.0
  %vm226 = vcmp.ge.f32.partialorder %v220, 0.0
  %v227 = vmul.f32 %v209, 0.2
  %v228 = vmul.f32 %v212, 0.2
  %v229 = vmul.f32 %v217, 0.2
  %v230 = vmul.f32 %v220, 0.2
  %v231 = vsel %vm223, %v209, %v227
  %v232 = vsel %vm224, %v212, %v228
  %v233 = vsel %vm225, %v217, %v229
  %v234 = vsel %vm226, %v220, %v230
  %vm235 = vcmask 261120
  %236 = vst.msk [vmem:[%s3] sm:$0xff] %vm235, %v231
  %237 = vst.msk [vmem:[%s3 + $0x8] sm:$0xff] %vm235, %v232
  %238 = vst.msk [vmem:[%s3 + $0x10] sm:$0xff] %vm235, %v233
  %239 = vst.msk [vmem:[%s3 + $0x18] sm:$0xff] %vm235, %v234
  // Predicated region
  $region14: #{image_embedding_forward.6} parent=0 // pred_check
    _
  $region15: #{image_embedding_forward.6} parent=0 // pred_check_branch
    %241 = sbr.rel (0) target = $region17
  $region16: #{image_embedding_forward.6} parent=0 // pred_region
    _
  $region17: #{image_embedding_forward.6} parent=0 // pred_fallthru
    _
  // Predicated region
  $region18: #{image_embedding_forward.6} parent=0 // pred_check
    _
  $region19: #{image_embedding_forward.6} parent=0 // pred_check_branch
    %243 = sbr.rel (0) target = $region21
  $region20: #{image_embedding_forward.6} parent=0 // pred_region
    _
  $region21: #{image_embedding_forward.6} parent=0 // pred_fallthru
    _

// kernel: image_embedding_forward.7
$region0: #{image_embedding_forward.7}
  #allocation0 [shape = 'u32[]', space=smem, size = 0x4, offset = 0x4, fixed_abs, tag = 'smem constant byte address 0x4 - core index']
  #allocation1 [shape = 'u32[144,128]{1,0:T(1,128)}', space=vmem, size = 0x12000, scoped, tag = 'internal scratch']
  %s0 = inlined_call_operand.vmem [shape: bf16[2,512], index: 0, kind: input, shape index: {}]
  %s1 = inlined_call_operand.vmem [shape: bf16[512,16], index: 1, kind: input, shape index: {}]
  %s2 = inlined_call_operand.vmem [shape: f32[1,16], index: 2, kind: input, shape index: {}]
  %s3 = inlined_call_operand.hbm [shape: f32[2,16], index: 3, kind: output, shape index: {}]
  %s4 = sld [smem:[#allocation0]]
  $region22: #{image_embedding_forward.7} parent=0
    _
  %s6 = ssub.s32 1, %s4
  %s7 = scalar_select 0, %s6, %s4
  $region1: #{image_embedding_forward.7} parent=0
    #allocation2 [shape = 'u8[1024]{0}', space=vmem, size = 0x400, scoped, tag = 'output window, operand 0, single buffered']
    #allocation3 [shape = 's32[1]{0}', space=sflag, size = 0x4, scoped, tag = 'scoped memory for image_embedding_forward.7']
    %8 = vsyncpa [#allocation3], 0
    // Predicated region
    $region2: #{image_embedding_forward.7} parent=1 // pred_check
      _
    $region3: #{image_embedding_forward.7} parent=1 // pred_check_branch
      %10 = sbr.rel (0) target = $region5
    $region4: #{image_embedding_forward.7} parent=1 // pred_region
      _
    $region5: #{image_embedding_forward.7} parent=1 // pred_fallthru
      _
    // Predicated region
    $region6: #{image_embedding_forward.7} parent=1 // pred_check
      _
    $region7: #{image_embedding_forward.7} parent=1 // pred_check_branch
      %12 = sbr.rel (0) target = $region9
    $region8: #{image_embedding_forward.7} parent=1 // pred_region
      _
    $region9: #{image_embedding_forward.7} parent=1 // pred_fallthru
      _
    // Predicated region
    $region10: #{image_embedding_forward.7} parent=1 // pred_check
      _
    $region11: #{image_embedding_forward.7} parent=1 // pred_check_branch
      %14 = sbr.rel (0) target = $region13
    $region12: #{image_embedding_forward.7} parent=1 // pred_region
      _
    $region13: #{image_embedding_forward.7} parent=1 // pred_fallthru
      _
    %v16 = vld [vmem:[%s0] sm:$0xf]
    %v17 = vld [vmem:[%s1] sm:$0xf]
    %v18 = vld [vmem:[%s1 + $0x4] sm:$0xf]
    %v19 = vld [vmem:[%s1 + $0x8] sm:$0xf]
    %v20 = vld [vmem:[%s1 + $0xc] sm:$0xf]
    %v21 = vld [vmem:[%s1 + $0x10] sm:$0xf]
    %v22 = vld [vmem:[%s1 + $0x14] sm:$0xf]
    %v23 = vld [vmem:[%s1 + $0x18] sm:$0xf]
    %v24 = vld [vmem:[%s1 + $0x1c] sm:$0xf]
    %v25 = vld [vmem:[%s1 + $0x20] sm:$0xf]
    %v26 = vld [vmem:[%s1 + $0x24] sm:$0xf]
    %v27 = vld [vmem:[%s1 + $0x28] sm:$0xf]
    %v28 = vld [vmem:[%s1 + $0x2c] sm:$0xf]
    %v29 = vld [vmem:[%s1 + $0x30] sm:$0xf]
    %v30 = vld [vmem:[%s1 + $0x34] sm:$0xf]
    %v31 = vld [vmem:[%s1 + $0x38] sm:$0xf]
    %v32 = vld [vmem:[%s1 + $0x3c] sm:$0xf]
    %v33 = vld [vmem:[%s1 + $0x40] sm:$0xf]
    %v34 = vld [vmem:[%s1 + $0x44] sm:$0xf]
    %v35 = vld [vmem:[%s1 + $0x48] sm:$0xf]
    %v36 = vld [vmem:[%s1 + $0x4c] sm:$0xf]
    %v37 = vld [vmem:[%s1 + $0x50] sm:$0xf]
    %v38 = vld [vmem:[%s1 + $0x54] sm:$0xf]
    %v39 = vld [vmem:[%s1 + $0x58] sm:$0xf]
    %v40 = vld [vmem:[%s1 + $0x5c] sm:$0xf]
    %v41 = vld [vmem:[%s1 + $0x60] sm:$0xf]
    %v42 = vld [vmem:[%s1 + $0x64] sm:$0xf]
    %v43 = vld [vmem:[%s1 + $0x68] sm:$0xf]
    %v44 = vld [vmem:[%s1 + $0x6c] sm:$0xf]
    %v45 = vld [vmem:[%s1 + $0x70] sm:$0xf]
    %v46 = vld [vmem:[%s1 + $0x74] sm:$0xf]
    %v47 = vld [vmem:[%s1 + $0x78] sm:$0xf]
    %v48 = vld [vmem:[%s1 + $0x7c] sm:$0xf]
    %v49 = vld [vmem:[%s1 + $0x80] sm:$0xf]
    %v50 = vld [vmem:[%s1 + $0x84] sm:$0xf]
    %v51 = vld [vmem:[%s1 + $0x88] sm:$0xf]
    %v52 = vld [vmem:[%s1 + $0x8c] sm:$0xf]
    %v53 = vld [vmem:[%s1 + $0x90] sm:$0xf]
    %v54 = vld [vmem:[%s1 + $0x94] sm:$0xf]
    %v55 = vld [vmem:[%s1 + $0x98] sm:$0xf]
    %v56 = vld [vmem:[%s1 + $0x9c] sm:$0xf]
    %v57 = vld [vmem:[%s1 + $0xa0] sm:$0xf]
    %v58 = vld [vmem:[%s1 + $0xa4] sm:$0xf]
    %v59 = vld [vmem:[%s1 + $0xa8] sm:$0xf]
    %v60 = vld [vmem:[%s1 + $0xac] sm:$0xf]
    %v61 = vld [vmem:[%s1 + $0xb0] sm:$0xf]
    %v62 = vld [vmem:[%s1 + $0xb4] sm:$0xf]
    %v63 = vld [vmem:[%s1 + $0xb8] sm:$0xf]
    %v64 = vld [vmem:[%s1 + $0xbc] sm:$0xf]
    %v65 = vld [vmem:[%s1 + $0xc0] sm:$0xf]
    %v66 = vld [vmem:[%s1 + $0xc4] sm:$0xf]
    %v67 = vld [vmem:[%s1 + $0xc8] sm:$0xf]
    %v68 = vld [vmem:[%s1 + $0xcc] sm:$0xf]
    %v69 = vld [vmem:[%s1 + $0xd0] sm:$0xf]
    %v70 = vld [vmem:[%s1 + $0xd4] sm:$0xf]
    %v71 = vld [vmem:[%s1 + $0xd8] sm:$0xf]
    %v72 = vld [vmem:[%s1 + $0xdc] sm:$0xf]
    %v73 = vld [vmem:[%s1 + $0xe0] sm:$0xf]
    %v74 = vld [vmem:[%s1 + $0xe4] sm:$0xf]
    %v75 = vld [vmem:[%s1 + $0xe8] sm:$0xf]
    %v76 = vld [vmem:[%s1 + $0xec] sm:$0xf]
    %v77 = vld [vmem:[%s1 + $0xf0] sm:$0xf]
    %v78 = vld [vmem:[%s1 + $0xf4] sm:$0xf]
    %v79 = vld [vmem:[%s1 + $0xf8] sm:$0xf]
    %v80 = vld [vmem:[%s1 + $0xfc] sm:$0xf]
    %v81 = vld [vmem:[%s2] sm:$0x1]
    %v83 = vlaneseq
    %v84 = vshrl.u32 %v83, 7
    %v85 = vsub.s32 0, %v84
    %v86 = vrot.slane %v81, %v85
    %v90 = vunpack.c.l.s4 1966171168
    %v91 = vunpack.c.0.s8 %v90
    %v92 = vlaneseq
    %v93 = vshrl.u32 %v92, 7
    %v94 = vsub.s32 %v91, %v93
    %v95 = vrot.slane %v16, %v94
    %v96 = vcombine.high %v95, %v95
    %v98 = vunpack.c.l.s4 1966171168
    %v99 = vunpack.c.0.s8 %v98
    %v100 = vlaneseq
    %v101 = vshrl.u32 %v100, 7
    %v102 = vsub.s32 %v99, %v101
    %v103 = vrot.slane %v95, %v102
    %v105 = vunpack.c.l.s4 1966171168
    %v106 = vunpack.c.0.s8 %v105
    %v107 = vlaneseq
    %v108 = vshrl.u32 %v107, 7
    %v109 = vsub.s32 %v106, %v108
    %v110 = vrot.slane %v96, %v109
    %v111 = vcombine.high %v103, %v103
    %v112 = vcombine.high %v110, %v110
    %v181 = vunpack.c.l.b16 %v17
    %v182 = vunpack.c.l.b16 %v18
    %v183 = vunpack.c.l.b16 %v19
    %v184 = vunpack.c.l.b16 %v20
    %v185 = vunpack.c.l.b16 %v21
    %v186 = vunpack.c.l.b16 %v22
    %v187 = vunpack.c.l.b16 %v23
    %v188 = vunpack.c.l.b16 %v24
    %v189 = vunpack.c.l.b16 %v25
    %v190 = vunpack.c.l.b16 %v26
    %v191 = vunpack.c.l.b16 %v27
    %v192 = vunpack.c.l.b16 %v28
    %v193 = vunpack.c.l.b16 %v29
    %v194 = vunpack.c.l.b16 %v30
    %v195 = vunpack.c.l.b16 %v31
    %v196 = vunpack.c.l.b16 %v32
    %v197 = vunpack.c.l.b16 %v33
    %v198 = vunpack.c.l.b16 %v34
    %v199 = vunpack.c.l.b16 %v35
    %v200 = vunpack.c.l.b16 %v36
    %v201 = vunpack.c.l.b16 %v37
    %v202 = vunpack.c.l.b16 %v38
    %v203 = vunpack.c.l.b16 %v39
    %v204 = vunpack.c.l.b16 %v40
    %v205 = vunpack.c.l.b16 %v41
    %v206 = vunpack.c.l.b16 %v42
    %v207 = vunpack.c.l.b16 %v43
    %v208 = vunpack.c.l.b16 %v44
    %v209 = vunpack.c.l.b16 %v45
    %v210 = vunpack.c.l.b16 %v46
    %v211 = vunpack.c.l.b16 %v47
    %v212 = vunpack.c.l.b16 %v48
    %v213 = vunpack.c.l.b16 %v49
    %v214 = vunpack.c.l.b16 %v50
    %v215 = vunpack.c.l.b16 %v51
    %v216 = vunpack.c.l.b16 %v52
    %v217 = vunpack.c.l.b16 %v53
    %v218 = vunpack.c.l.b16 %v54
    %v219 = vunpack.c.l.b16 %v55
    %v220 = vunpack.c.l.b16 %v56
    %v221 = vunpack.c.l.b16 %v57
    %v222 = vunpack.c.l.b16 %v58
    %v223 = vunpack.c.l.b16 %v59
    %v224 = vunpack.c.l.b16 %v60
    %v225 = vunpack.c.l.b16 %v61
    %v226 = vunpack.c.l.b16 %v62
    %v227 = vunpack.c.l.b16 %v63
    %v228 = vunpack.c.l.b16 %v64
    %v229 = vunpack.c.l.b16 %v65
    %v230 = vunpack.c.l.b16 %v66
    %v231 = vunpack.c.l.b16 %v67
    %v232 = vunpack.c.l.b16 %v68
    %v233 = vunpack.c.l.b16 %v69
    %v234 = vunpack.c.l.b16 %v70
    %v235 = vunpack.c.l.b16 %v71
    %v236 = vunpack.c.l.b16 %v72
    %v237 = vunpack.c.l.b16 %v73
    %v238 = vunpack.c.l.b16 %v74
    %v239 = vunpack.c.l.b16 %v75
    %v240 = vunpack.c.l.b16 %v76
    %v241 = vunpack.c.l.b16 %v77
    %v242 = vunpack.c.l.b16 %v78
    %v243 = vunpack.c.l.b16 %v79
    %v244 = vunpack.c.l.b16 %v80
    %v245 = vpack.c.b16 %v182, %v181
    %v246 = vpack.c.b16 %v184, %v183
    %v247 = vpack.c.b16 %v186, %v185
    %v248 = vpack.c.b16 %v188, %v187
    %v249 = vpack.c.b16 %v190, %v189
    %v250 = vpack.c.b16 %v192, %v191
    %v251 = vpack.c.b16 %v194, %v193
    %v252 = vpack.c.b16 %v196, %v195
    %v253 = vpack.c.b16 %v198, %v197
    %v254 = vpack.c.b16 %v200, %v199
    %v255 = vpack.c.b16 %v202, %v201
    %v256 = vpack.c.b16 %v204, %v203
    %v257 = vpack.c.b16 %v206, %v205
    %v258 = vpack.c.b16 %v208, %v207
    %v259 = vpack.c.b16 %v210, %v209
    %v260 = vpack.c.b16 %v212, %v211
    %v261 = vpack.c.b16 %v214, %v213
    %v262 = vpack.c.b16 %v216, %v215
    %v263 = vpack.c.b16 %v218, %v217
    %v264 = vpack.c.b16 %v220, %v219
    %v265 = vpack.c.b16 %v222, %v221
    %v266 = vpack.c.b16 %v224, %v223
    %v267 = vpack.c.b16 %v226, %v225
    %v268 = vpack.c.b16 %v228, %v227
    %v269 = vpack.c.b16 %v230, %v229
    %v270 = vpack.c.b16 %v232, %v231
    %v271 = vpack.c.b16 %v234, %v233
    %v272 = vpack.c.b16 %v236, %v235
    %v273 = vpack.c.b16 %v238, %v237
    %v274 = vpack.c.b16 %v240, %v239
    %v275 = vpack.c.b16 %v242, %v241
    %v276 = vpack.c.b16 %v244, %v243
    %309 = vmatprep.subr.bf16.mxu0 0
    %310 = vmatpush1.bf16.msra.mxu0 %v245
    %311 = vmatprep.subr.bf16.mxu0 0
    %312 = vmatpush1.bf16.msra.mxu0 %v246
    %313 = vmatprep.subr.bf16.mxu0 0
    %314 = vmatpush1.bf16.msra.mxu0 %v247
    %315 = vmatprep.subr.bf16.mxu0 0
    %316 = vmatpush1.bf16.msra.mxu0 %v248
    %317 = vmatprep.subr.bf16.mxu0 0
    %318 = vmatpush1.bf16.msra.mxu0 %v249
    %319 = vmatprep.subr.bf16.mxu0 0
    %320 = vmatpush1.bf16.msra.mxu0 %v250
    %321 = vmatprep.subr.bf16.mxu0 0
    %322 = vmatpush1.bf16.msra.mxu0 %v251
    %323 = vmatprep.subr.bf16.mxu0 0
    %324 = vmatpush1.bf16.msra.mxu0 %v252
    %325 = vmatprep.subr.bf16.mxu0 0
    %326 = vmatpush1.bf16.msra.mxu0 %v253
    %327 = vmatprep.subr.bf16.mxu0 0
    %328 = vmatpush1.bf16.msra.mxu0 %v254
    %329 = vmatprep.subr.bf16.mxu0 0
    %330 = vmatpush1.bf16.msra.mxu0 %v255
    %331 = vmatprep.subr.bf16.mxu0 0
    %332 = vmatpush1.bf16.msra.mxu0 %v256
    %333 = vmatprep.subr.bf16.mxu0 0
    %334 = vmatpush1.bf16.msra.mxu0 %v257
    %335 = vmatprep.subr.bf16.mxu0 0
    %336 = vmatpush1.bf16.msra.mxu0 %v258
    %337 = vmatprep.subr.bf16.mxu0 0
    %338 = vmatpush1.bf16.msra.mxu0 %v259
    %339 = vmatprep.subr.bf16.mxu0 0
    %340 = vmatpush1.bf16.msra.mxu0 %v260
    %341 = vmatprep.mubr.bf16.mxu0 %v110
    %342 = vmatmul.mubr.bf16.gmra.mrb[0].mxu0 %v103
    %v343 = vpop.f32.mrb[0].mxu0
    %v344 = vadd.f32 %v86, %v343
    %v345 = vpop.f32.mrb[0].mxu0
    %v346 = vpop.f32.mrb[0].mxu0
    %v347 = vpop.f32.mrb[0].mxu0
    %348 = vdwg.mxu0
    %349 = vmatprep.subr.bf16.mxu0 0
    %350 = vmatpush1.bf16.msra.mxu0 %v261
    %351 = vmatprep.subr.bf16.mxu0 0
    %352 = vmatpush1.bf16.msra.mxu0 %v262
    %353 = vmatprep.subr.bf16.mxu0 0
    %354 = vmatpush1.bf16.msra.mxu0 %v263
    %355 = vmatprep.subr.bf16.mxu0 0
    %356 = vmatpush1.bf16.msra.mxu0 %v264
    %357 = vmatprep.subr.bf16.mxu0 0
    %358 = vmatpush1.bf16.msra.mxu0 %v265
    %359 = vmatprep.subr.bf16.mxu0 0
    %360 = vmatpush1.bf16.msra.mxu0 %v266
    %361 = vmatprep.subr.bf16.mxu0 0
    %362 = vmatpush1.bf16.msra.mxu0 %v267
    %363 = vmatprep.subr.bf16.mxu0 0
    %364 = vmatpush1.bf16.msra.mxu0 %v268
    %365 = vmatprep.subr.bf16.mxu0 0
    %366 = vmatpush1.bf16.msra.mxu0 %v269
    %367 = vmatprep.subr.bf16.mxu0 0
    %368 = vmatpush1.bf16.msra.mxu0 %v270
    %369 = vmatprep.subr.bf16.mxu0 0
    %370 = vmatpush1.bf16.msra.mxu0 %v271
    %371 = vmatprep.subr.bf16.mxu0 0
    %372 = vmatpush1.bf16.msra.mxu0 %v272
    %373 = vmatprep.subr.bf16.mxu0 0
    %374 = vmatpush1.bf16.msra.mxu0 %v273
    %375 = vmatprep.subr.bf16.mxu0 0
    %376 = vmatpush1.bf16.msra.mxu0 %v274
    %377 = vmatprep.subr.bf16.mxu0 0
    %378 = vmatpush1.bf16.msra.mxu0 %v275
    %379 = vmatprep.subr.bf16.mxu0 0
    %380 = vmatpush1.bf16.msra.mxu0 %v276
    %381 = vmatprep.mubr.bf16.mxu0 %v112
    %382 = vmatmul.mubr.bf16.gmra.mrb[0].mxu0 %v111
    %v383 = vpop.f32.mrb[0].mxu0
    %v384 = vadd.f32 %v344, %v383
    %v385 = vpop.f32.mrb[0].mxu0
    %v386 = vpop.f32.mrb[0].mxu0
    %v387 = vpop.f32.mrb[0].mxu0
    %388 = vdwg.mxu0
    %vm389 = vcmp.ge.f32.partialorder %v384, 0.0
    %v390 = vmul.f32 %v384, 0.2
    %v391 = vsel %vm389, %v384, %v390
    %vm392 = vcmask 123904
    %393 = vst.msk [vmem:[#allocation2] sm:$0x3] %vm392, %v391
    // Predicated region
    $region14: #{image_embedding_forward.7} parent=1 // pred_check
      _
    $region15: #{image_embedding_forward.7} parent=1 // pred_check_branch
      %395 = sbr.rel (0) target = $region17
    $region16: #{image_embedding_forward.7} parent=1 // pred_region
      %s397 = ssub.s32 32, 32
      %398 = vsyncadd [#allocation3], %s397
      %s400 = sshll.u32 [#allocation2], 4
      %s401 = int_to_ptr.vmem [resolvable:$true] %s400
      %403 = dma.vmem_to_hbm [thread:$0]  %s401, 32, %s3, [#allocation3]
    $region17: #{image_embedding_forward.7} parent=1 // pred_fallthru
      _
    // Predicated region
    $region18: #{image_embedding_forward.7} parent=1 // pred_check
      _
    $region19: #{image_embedding_forward.7} parent=1 // pred_check_branch
      %405 = sbr.rel (0) target = $region21
    $region20: #{image_embedding_forward.7} parent=1 // pred_region
      %406 = dma.done [#allocation3], 32
    $region21: #{image_embedding_forward.7} parent=1 // pred_fallthru
      _
    %407 = vsyncpa [#allocation3], 1

</llo_original>
